<compile_context>
chip_gen: v7x
topology: tpu7x:2x2x1
jax: 0.10.0
libtpu: 0.0.40
codegen_flags: <defaults>
</compile_context>

<pallas_src>
import jax
import jax.numpy as jnp
from jax.experimental import pallas as pl
from jax.experimental.pallas import tpu as pltpu

# ----------------------------- model config ---------------------------------
B = 2            # batch
S = 8            # sequence length (max_length analogue, small)
H = 32           # hidden size
NH = 2           # attention heads
HD = H // NH     # head dim
FFN = 64         # intermediate size
VOCAB = 100      # vocab size
PROJ = 64        # projection_dim analogue (512 in the original, small here)
LAYERS = 2       # encoder layers
LN_EPS = 1e-12

# padded widths (padded rows/columns are zero -> math is unchanged)
VOCAB_PAD = 128  # embedding table rows padded 100 -> 128 (ids never hit padding)
QKV_PAD = 128    # holds [Wq | Wk | Wv] (3*H = 96) padded to 128 lanes
PROJ_PAD = 128   # projection output padded 64 -> 128 (sliced back in wrapper)


# ------------------------------ fused kernel ---------------------------------
def _student_kernel(
    ids_ref, mask_ref,
    wemb_ref, pos_ref,
    emb_g_ref, emb_b_ref,
    wqkv_ref, bqkv_ref, wo_ref, bo_ref,
    ln1g_ref, ln1b_ref,
    w1_ref, b1_ref, w2_ref, b2_ref,
    ln2g_ref, ln2b_ref,
    projw_ref, projb_ref,
    o_ref,
):
    f32 = jnp.float32
    bf16 = jnp.bfloat16

    def layer_norm(x, g, b):
        mu = jnp.mean(x, axis=-1, keepdims=True)
        var = jnp.mean((x - mu) * (x - mu), axis=-1, keepdims=True)
        return (x - mu) * jax.lax.rsqrt(var + LN_EPS) * g + b

    # ---- in-kernel embedding gather via one-hot matmul (exact: 0/1 weights) --
    ids = ids_ref[...]                                              # (B*S, 1) int32
    iota = jax.lax.broadcasted_iota(jnp.int32, (B * S, VOCAB_PAD), 1)
    onehot = jnp.where(iota == ids, 1.0, 0.0).astype(bf16)          # (B*S, VOCAB_PAD)
    emb = jnp.dot(onehot, wemb_ref[...], preferred_element_type=f32)  # (B*S, H)
    x3 = emb.reshape(B, S, H) + pos_ref[...]                        # broadcast pos over batch
    x = layer_norm(x3, emb_g_ref[...], emb_b_ref[...]).reshape(B * S, H)

    # ---- in-kernel additive attention bias from the raw 0/1 mask -------------
    bias = (1.0 - mask_ref[...].astype(f32)) * f32(-1e9)            # (B, 1, S)

    scale = 1.0 / (HD ** 0.5)

    for l in range(LAYERS):                 # static unroll, weights VMEM-resident
        # ---- fused QKV projection: one lane-dense bf16 matmul ----------------
        qkv = jnp.dot(x.astype(bf16), wqkv_ref[l],
                      preferred_element_type=f32) + bqkv_ref[l]     # (B*S, QKV_PAD)
        q = qkv[:, 0:H]                      # 32-lane-aligned slices
        k = qkv[:, H:2 * H]
        v = qkv[:, 2 * H:3 * H]

        # ---- attention, batched over B, static loop over heads ---------------
        ctx_heads = []
        for h in range(NH):
            qh = q[:, h * HD:(h + 1) * HD].reshape(B, S, HD).astype(bf16)
            kh = k[:, h * HD:(h + 1) * HD].reshape(B, S, HD).astype(bf16)
            vh = v[:, h * HD:(h + 1) * HD].reshape(B, S, HD).astype(bf16)

            s = jnp.einsum("bqd,bkd->bqk", qh, kh,
                           preferred_element_type=f32) * scale       # (B, S, S)
            s = s + bias                                            # mask padded keys
            s = s - jnp.max(s, axis=-1, keepdims=True)
            p = jnp.exp(s)
            p = p * pl.reciprocal(jnp.sum(p, axis=-1, keepdims=True), approx=True)
            ctx = jnp.einsum("bqk,bkd->bqd", p.astype(bf16), vh,
                             preferred_element_type=f32)            # (B, S, HD)
            ctx_heads.append(ctx.reshape(B * S, HD))

        # single K=32 output projection on lane-concatenated heads
        ctx_all = jnp.concatenate(ctx_heads, axis=-1).astype(bf16)  # (B*S, H)
        attn_out = jnp.dot(ctx_all, wo_ref[l],
                           preferred_element_type=f32) + bo_ref[l]

        # ---- residual + LN, FFN (f32 elementwise), residual + LN -------------
        x1 = layer_norm(x + attn_out, ln1g_ref[l], ln1b_ref[l])
        h1 = jnp.dot(x1.astype(bf16), w1_ref[l],
                     preferred_element_type=f32) + b1_ref[l]        # (B*S, FFN)
        h1 = jax.nn.gelu(h1, approximate=True)
        h2 = jnp.dot(h1.astype(bf16), w2_ref[l],
                     preferred_element_type=f32) + b2_ref[l]        # K=64, no pad
        x = layer_norm(x1 + h2, ln2g_ref[l], ln2b_ref[l])

    # ---- CLS pooling (single strided slice) + projection + L2 normalize ------
    cls = x.reshape(B, S, H)[:, 0, :]                               # (B, H)
    y = jnp.dot(cls.astype(bf16), projw_ref[...],
                preferred_element_type=f32) + projb_ref[...]        # (B, PROJ_PAD)
    # torch F.normalize(p=2, dim=1, eps=1e-12): y / max(||y||, 1e-12)
    nrm2 = jnp.sum(y * y, axis=-1, keepdims=True)
    o_ref[...] = y * jax.lax.rsqrt(jnp.maximum(nrm2, 1e-24))


# ------------------------------ parameters -----------------------------------
def init_params(key):
    ks = iter(jax.random.split(key, 32))

    def rnd(shape):
        return 0.02 * jax.random.normal(next(ks), shape, jnp.float32)

    def pad_last(x, to):
        return jnp.pad(x, [(0, 0)] * (x.ndim - 1) + [(0, to - x.shape[-1])])

    bf16 = jnp.bfloat16
    return {
        # embedding table padded to 128 rows (ids < 100 never hit padding); bf16
        "word_emb": jnp.pad(rnd((VOCAB, H)), ((0, VOCAB_PAD - VOCAB), (0, 0))).astype(bf16),
        "pos_emb": rnd((S, H)),
        "emb_ln_g": jnp.ones((1, H), jnp.float32),
        "emb_ln_b": jnp.zeros((1, H), jnp.float32),
        # fused [Wq|Wk|Wv], zero-padded to 128 output lanes; bf16 for the MXU
        "wqkv": pad_last(rnd((LAYERS, H, 3 * H)), QKV_PAD).astype(bf16),
        "bqkv": jnp.zeros((LAYERS, 1, QKV_PAD), jnp.float32),
        "wo": rnd((LAYERS, H, H)).astype(bf16),
        "bo": jnp.zeros((LAYERS, 1, H), jnp.float32),
        "ln1_g": jnp.ones((LAYERS, 1, H), jnp.float32),
        "ln1_b": jnp.zeros((LAYERS, 1, H), jnp.float32),
        # FFN kept at its natural 64-wide contraction (no K padding)
        "w1": rnd((LAYERS, H, FFN)).astype(bf16),
        "b1": jnp.zeros((LAYERS, 1, FFN), jnp.float32),
        "w2": rnd((LAYERS, FFN, H)).astype(bf16),
        "b2": jnp.zeros((LAYERS, 1, H), jnp.float32),
        "ln2_g": jnp.ones((LAYERS, 1, H), jnp.float32),
        "ln2_b": jnp.zeros((LAYERS, 1, H), jnp.float32),
        # projection padded 64 -> 128 output lanes (extra cols zero -> L2 norm unchanged)
        "proj_w": pad_last(rnd((H, PROJ)), PROJ_PAD).astype(bf16),
        "proj_b": jnp.zeros((1, PROJ_PAD), jnp.float32),
    }


# ------------------------------ forward pass ----------------------------------
def student_forward(params, input_ids, attention_mask):
    # Only free metadata reshapes happen outside the kernel: embedding gather,
    # positional add, LayerNorms, attention, FFN, pooling, projection and the
    # L2-normalize all run inside ONE fused Pallas kernel.
    ids = input_ids.reshape(B * S, 1).astype(jnp.int32)
    mask = attention_mask.reshape(B, 1, S).astype(jnp.int32)

    n_inputs = 20
    vmem_spec = pl.BlockSpec(memory_space=pltpu.MemorySpace.VMEM)

    out_padded = pl.pallas_call(
        _student_kernel,
        out_shape=jax.ShapeDtypeStruct((B, PROJ_PAD), jnp.float32),
        in_specs=[vmem_spec] * n_inputs,
        out_specs=vmem_spec,
        cost_estimate=pl.CostEstimate(
            flops=1_000_000, transcendentals=10_000, bytes_accessed=130_000),
    )(
        ids, mask,
        params["word_emb"], params["pos_emb"],
        params["emb_ln_g"], params["emb_ln_b"],
        params["wqkv"], params["bqkv"],
        params["wo"], params["bo"],
        params["ln1_g"], params["ln1_b"],
        params["w1"], params["b1"],
        params["w2"], params["b2"],
        params["ln2_g"], params["ln2_b"],
        params["proj_w"], params["proj_b"],
    )
    return out_padded[:, :PROJ]                                      # (B, PROJ)


# --------------------------------- main ---------------------------------------
if __name__ == "__main__":
    key = jax.random.PRNGKey(0)
    pkey, ikey = jax.random.split(key)
    params = init_params(pkey)

    input_ids = jax.random.randint(ikey, (B, S), 0, VOCAB, dtype=jnp.int32)
    attention_mask = jnp.ones((B, S), dtype=jnp.int32).at[:, S - 2:].set(0)  # pad last 2 tokens

    out = jax.jit(student_forward)(params, input_ids, attention_mask)
    out = jax.block_until_ready(out)

    assert out.shape == (B, PROJ)
    norms = jnp.sqrt(jnp.sum(out * out, axis=1))
    assert bool(jnp.all(jnp.abs(norms - 1.0) < 1e-4))
    print("KERNEL_OK")
</pallas_src>

<mosaic_0001>
module attributes {stable_mosaic.version = 11 : i64} {
  func.func @_student_kernel(%arg0: memref<16x1xi32, #tpu.memory_space<vmem>>, %arg1: memref<2x1x8xi32, #tpu.memory_space<vmem>>, %arg2: memref<128x32xbf16, #tpu.memory_space<vmem>>, %arg3: memref<8x32xf32, #tpu.memory_space<vmem>>, %arg4: memref<1x32xf32, #tpu.memory_space<vmem>>, %arg5: memref<1x32xf32, #tpu.memory_space<vmem>>, %arg6: memref<2x32x128xbf16, #tpu.memory_space<vmem>>, %arg7: memref<2x1x128xf32, #tpu.memory_space<vmem>>, %arg8: memref<2x32x32xbf16, #tpu.memory_space<vmem>>, %arg9: memref<2x1x32xf32, #tpu.memory_space<vmem>>, %arg10: memref<2x1x32xf32, #tpu.memory_space<vmem>>, %arg11: memref<2x1x32xf32, #tpu.memory_space<vmem>>, %arg12: memref<2x32x64xbf16, #tpu.memory_space<vmem>>, %arg13: memref<2x1x64xf32, #tpu.memory_space<vmem>>, %arg14: memref<2x64x32xbf16, #tpu.memory_space<vmem>>, %arg15: memref<2x1x32xf32, #tpu.memory_space<vmem>>, %arg16: memref<2x1x32xf32, #tpu.memory_space<vmem>>, %arg17: memref<2x1x32xf32, #tpu.memory_space<vmem>>, %arg18: memref<32x128xbf16, #tpu.memory_space<vmem>>, %arg19: memref<1x128xf32, #tpu.memory_space<vmem>>, %arg20: memref<2x128xf32, #tpu.memory_space<vmem>>) attributes {dimension_semantics = [], scalar_prefetch = 0 : i64, scratch_operands = 0 : i64, tpu.core_type = #tpu.core_type<tc>} {
    %c0 = arith.constant 0 : index
    %c0_0 = arith.constant 0 : index
    %0 = vector.load %arg0[%c0, %c0_0] : memref<16x1xi32, #tpu.memory_space<vmem>>, vector<16x1xi32>
    %1 = tpu.iota {dimensions = array<i32: 1>} : vector<16x128xi32>
    %2 = vector.broadcast %0 : vector<16x1xi32> to vector<16x128xi32>
    %3 = arith.cmpi eq, %1, %2 : vector<16x128xi32>
    %cst = arith.constant 1.000000e+00 : f32
    %cst_1 = arith.constant 0.000000e+00 : f32
    %4 = vector.broadcast %cst : f32 to vector<16x128xf32>
    %5 = vector.broadcast %cst_1 : f32 to vector<16x128xf32>
    %6 = arith.select %3, %4, %5 : vector<16x128xi1>, vector<16x128xf32>
    %7 = arith.truncf %6 : vector<16x128xf32> to vector<16x128xbf16>
    %c0_2 = arith.constant 0 : index
    %c0_3 = arith.constant 0 : index
    %8 = vector.load %arg2[%c0_2, %c0_3] : memref<128x32xbf16, #tpu.memory_space<vmem>>, vector<128x32xbf16>
    %cst_4 = arith.constant dense<0.000000e+00> : vector<16x32xf32>
    %9 = tpu.matmul %7, %8, %cst_4 {dimension_numbers = #tpu.dot_dimension_numbers<[1], [0], [0], [1], [0, 0, 1, 1], [], []>} : vector<16x128xbf16>, vector<128x32xbf16>, vector<16x32xf32> -> vector<16x32xf32>
    %10 = vector.shape_cast %9 : vector<16x32xf32> to vector<2x8x32xf32>
    %c0_5 = arith.constant 0 : index
    %c0_6 = arith.constant 0 : index
    %11 = vector.load %arg3[%c0_5, %c0_6] : memref<8x32xf32, #tpu.memory_space<vmem>>, vector<8x32xf32>
    %12 = vector.shape_cast %11 : vector<8x32xf32> to vector<1x8x32xf32>
    %13 = vector.broadcast %12 : vector<1x8x32xf32> to vector<2x8x32xf32>
    %14 = arith.addf %10, %13 : vector<2x8x32xf32>
    %c0_7 = arith.constant 0 : index
    %c0_8 = arith.constant 0 : index
    %15 = vector.load %arg4[%c0_7, %c0_8] : memref<1x32xf32, #tpu.memory_space<vmem>>, vector<1x32xf32>
    %c0_9 = arith.constant 0 : index
    %c0_10 = arith.constant 0 : index
    %16 = vector.load %arg5[%c0_9, %c0_10] : memref<1x32xf32, #tpu.memory_space<vmem>>, vector<1x32xf32>
    %cst_11 = arith.constant dense<0.000000e+00> : vector<2x8xf32>
    %17 = vector.multi_reduction <add>, %14, %cst_11 [2] : vector<2x8x32xf32> to vector<2x8xf32>
    %18 = vector.shape_cast %17 : vector<2x8xf32> to vector<2x8x1xf32>
    %cst_12 = arith.constant 3.200000e+01 : f32
    %19 = vector.broadcast %cst_12 : f32 to vector<2x8x1xf32>
    %20 = arith.divf %18, %19 : vector<2x8x1xf32>
    %21 = vector.broadcast %20 : vector<2x8x1xf32> to vector<2x8x32xf32>
    %22 = arith.subf %14, %21 : vector<2x8x32xf32>
    %23 = vector.broadcast %20 : vector<2x8x1xf32> to vector<2x8x32xf32>
    %24 = arith.subf %14, %23 : vector<2x8x32xf32>
    %25 = arith.mulf %22, %24 : vector<2x8x32xf32>
    %cst_13 = arith.constant dense<0.000000e+00> : vector<2x8xf32>
    %26 = vector.multi_reduction <add>, %25, %cst_13 [2] : vector<2x8x32xf32> to vector<2x8xf32>
    %27 = vector.shape_cast %26 : vector<2x8xf32> to vector<2x8x1xf32>
    %cst_14 = arith.constant 3.200000e+01 : f32
    %28 = vector.broadcast %cst_14 : f32 to vector<2x8x1xf32>
    %29 = arith.divf %27, %28 : vector<2x8x1xf32>
    %30 = vector.broadcast %20 : vector<2x8x1xf32> to vector<2x8x32xf32>
    %31 = arith.subf %14, %30 : vector<2x8x32xf32>
    %cst_15 = arith.constant 9.99999996E-13 : f32
    %32 = vector.broadcast %cst_15 : f32 to vector<2x8x1xf32>
    %33 = arith.addf %29, %32 : vector<2x8x1xf32>
    %34 = math.rsqrt %33 : vector<2x8x1xf32>
    %35 = vector.broadcast %34 : vector<2x8x1xf32> to vector<2x8x32xf32>
    %36 = arith.mulf %31, %35 : vector<2x8x32xf32>
    %37 = vector.shape_cast %15 : vector<1x32xf32> to vector<1x1x32xf32>
    %38 = vector.broadcast %37 : vector<1x1x32xf32> to vector<2x8x32xf32>
    %39 = arith.mulf %36, %38 : vector<2x8x32xf32>
    %40 = vector.shape_cast %16 : vector<1x32xf32> to vector<1x1x32xf32>
    %41 = vector.broadcast %40 : vector<1x1x32xf32> to vector<2x8x32xf32>
    %42 = arith.addf %39, %41 : vector<2x8x32xf32>
    %43 = vector.shape_cast %42 : vector<2x8x32xf32> to vector<16x32xf32>
    %c0_16 = arith.constant 0 : index
    %c0_17 = arith.constant 0 : index
    %c0_18 = arith.constant 0 : index
    %44 = vector.load %arg1[%c0_16, %c0_17, %c0_18] : memref<2x1x8xi32, #tpu.memory_space<vmem>>, vector<2x1x8xi32>
    %45 = arith.sitofp %44 : vector<2x1x8xi32> to vector<2x1x8xf32>
    %cst_19 = arith.constant 1.000000e+00 : f32
    %46 = vector.broadcast %cst_19 : f32 to vector<2x1x8xf32>
    %47 = arith.subf %46, %45 : vector<2x1x8xf32>
    %cst_20 = arith.constant -1.000000e+09 : f32
    %48 = vector.broadcast %cst_20 : f32 to vector<2x1x8xf32>
    %49 = arith.mulf %47, %48 : vector<2x1x8xf32>
    %50 = arith.truncf %43 : vector<16x32xf32> to vector<16x32xbf16>
    %c0_21 = arith.constant 0 : index
    %c0_22 = arith.constant 0 : index
    %c0_23 = arith.constant 0 : index
    %51 = vector.load %arg6[%c0_21, %c0_22, %c0_23] : memref<2x32x128xbf16, #tpu.memory_space<vmem>>, vector<1x32x128xbf16>
    %52 = vector.shape_cast %51 : vector<1x32x128xbf16> to vector<32x128xbf16>
    %cst_24 = arith.constant dense<0.000000e+00> : vector<16x128xf32>
    %53 = tpu.matmul %50, %52, %cst_24 {dimension_numbers = #tpu.dot_dimension_numbers<[1], [0], [0], [1], [0, 0, 1, 1], [], []>} : vector<16x32xbf16>, vector<32x128xbf16>, vector<16x128xf32> -> vector<16x128xf32>
    %c0_25 = arith.constant 0 : index
    %c0_26 = arith.constant 0 : index
    %c0_27 = arith.constant 0 : index
    %54 = vector.load %arg7[%c0_25, %c0_26, %c0_27] : memref<2x1x128xf32, #tpu.memory_space<vmem>>, vector<1x1x128xf32>
    %55 = vector.shape_cast %54 : vector<1x1x128xf32> to vector<1x128xf32>
    %56 = vector.broadcast %55 : vector<1x128xf32> to vector<16x128xf32>
    %57 = arith.addf %53, %56 : vector<16x128xf32>
    %58 = vector.extract_strided_slice %57 {offsets = [0, 0], sizes = [16, 32], strides = [1, 1]} : vector<16x128xf32> to vector<16x32xf32>
    %59 = vector.extract_strided_slice %57 {offsets = [0, 32], sizes = [16, 32], strides = [1, 1]} : vector<16x128xf32> to vector<16x32xf32>
    %60 = vector.extract_strided_slice %57 {offsets = [0, 64], sizes = [16, 32], strides = [1, 1]} : vector<16x128xf32> to vector<16x32xf32>
    %61 = vector.extract_strided_slice %58 {offsets = [0, 0], sizes = [16, 16], strides = [1, 1]} : vector<16x32xf32> to vector<16x16xf32>
    %62 = vector.shape_cast %61 : vector<16x16xf32> to vector<2x8x16xf32>
    %63 = arith.truncf %62 : vector<2x8x16xf32> to vector<2x8x16xbf16>
    %64 = vector.extract_strided_slice %59 {offsets = [0, 0], sizes = [16, 16], strides = [1, 1]} : vector<16x32xf32> to vector<16x16xf32>
    %65 = vector.shape_cast %64 : vector<16x16xf32> to vector<2x8x16xf32>
    %66 = arith.truncf %65 : vector<2x8x16xf32> to vector<2x8x16xbf16>
    %67 = vector.extract_strided_slice %60 {offsets = [0, 0], sizes = [16, 16], strides = [1, 1]} : vector<16x32xf32> to vector<16x16xf32>
    %68 = vector.shape_cast %67 : vector<16x16xf32> to vector<2x8x16xf32>
    %69 = arith.truncf %68 : vector<2x8x16xf32> to vector<2x8x16xbf16>
    "tpu.trace_start"() <{level = 10 : i32, message = "bqd,bkd->bqk"}> : () -> ()
    %cst_28 = arith.constant dense<0.000000e+00> : vector<2x8x8xf32>
    %70 = tpu.matmul %63, %66, %cst_28 {dimension_numbers = #tpu.dot_dimension_numbers<[2], [2], [1], [1], [0, 0, 0, 1, 1, 1], [0], [0]>} : vector<2x8x16xbf16>, vector<2x8x16xbf16>, vector<2x8x8xf32> -> vector<2x8x8xf32>
    "tpu.trace_stop"() : () -> ()
    %cst_29 = arith.constant 2.500000e-01 : f32
    %71 = vector.broadcast %cst_29 : f32 to vector<2x8x8xf32>
    %72 = arith.mulf %70, %71 : vector<2x8x8xf32>
    %73 = vector.broadcast %49 : vector<2x1x8xf32> to vector<2x8x8xf32>
    %74 = arith.addf %72, %73 : vector<2x8x8xf32>
    %cst_30 = arith.constant dense<0xFF800000> : vector<2x8xf32>
    %75 = vector.multi_reduction <maximumf>, %74, %cst_30 [2] : vector<2x8x8xf32> to vector<2x8xf32>
    %76 = vector.shape_cast %75 : vector<2x8xf32> to vector<2x8x1xf32>
    %77 = vector.broadcast %76 : vector<2x8x1xf32> to vector<2x8x8xf32>
    %78 = arith.subf %74, %77 : vector<2x8x8xf32>
    %79 = math.exp %78 : vector<2x8x8xf32>
    %cst_31 = arith.constant dense<0.000000e+00> : vector<2x8xf32>
    %80 = vector.multi_reduction <add>, %79, %cst_31 [2] : vector<2x8x8xf32> to vector<2x8xf32>
    %81 = vector.shape_cast %80 : vector<2x8xf32> to vector<2x8x1xf32>
    %82 = tpu.reciprocal %81 {approx = true} : vector<2x8x1xf32> -> vector<2x8x1xf32>
    %83 = vector.broadcast %82 : vector<2x8x1xf32> to vector<2x8x8xf32>
    %84 = arith.mulf %79, %83 : vector<2x8x8xf32>
    %85 = arith.truncf %84 : vector<2x8x8xf32> to vector<2x8x8xbf16>
    "tpu.trace_start"() <{level = 10 : i32, message = "bqk,bkd->bqd"}> : () -> ()
    %cst_32 = arith.constant dense<0.000000e+00> : vector<2x8x16xf32>
    %86 = tpu.matmul %85, %69, %cst_32 {dimension_numbers = #tpu.dot_dimension_numbers<[2], [1], [1], [2], [0, 0, 0, 1, 1, 2], [0], [0]>} : vector<2x8x8xbf16>, vector<2x8x16xbf16>, vector<2x8x16xf32> -> vector<2x8x16xf32>
    "tpu.trace_stop"() : () -> ()
    %87 = vector.shape_cast %86 : vector<2x8x16xf32> to vector<16x16xf32>
    %88 = vector.extract_strided_slice %58 {offsets = [0, 16], sizes = [16, 16], strides = [1, 1]} : vector<16x32xf32> to vector<16x16xf32>
    %89 = vector.shape_cast %88 : vector<16x16xf32> to vector<2x8x16xf32>
    %90 = arith.truncf %89 : vector<2x8x16xf32> to vector<2x8x16xbf16>
    %91 = vector.extract_strided_slice %59 {offsets = [0, 16], sizes = [16, 16], strides = [1, 1]} : vector<16x32xf32> to vector<16x16xf32>
    %92 = vector.shape_cast %91 : vector<16x16xf32> to vector<2x8x16xf32>
    %93 = arith.truncf %92 : vector<2x8x16xf32> to vector<2x8x16xbf16>
    %94 = vector.extract_strided_slice %60 {offsets = [0, 16], sizes = [16, 16], strides = [1, 1]} : vector<16x32xf32> to vector<16x16xf32>
    %95 = vector.shape_cast %94 : vector<16x16xf32> to vector<2x8x16xf32>
    %96 = arith.truncf %95 : vector<2x8x16xf32> to vector<2x8x16xbf16>
    "tpu.trace_start"() <{level = 10 : i32, message = "bqd,bkd->bqk"}> : () -> ()
    %cst_33 = arith.constant dense<0.000000e+00> : vector<2x8x8xf32>
    %97 = tpu.matmul %90, %93, %cst_33 {dimension_numbers = #tpu.dot_dimension_numbers<[2], [2], [1], [1], [0, 0, 0, 1, 1, 1], [0], [0]>} : vector<2x8x16xbf16>, vector<2x8x16xbf16>, vector<2x8x8xf32> -> vector<2x8x8xf32>
    "tpu.trace_stop"() : () -> ()
    %cst_34 = arith.constant 2.500000e-01 : f32
    %98 = vector.broadcast %cst_34 : f32 to vector<2x8x8xf32>
    %99 = arith.mulf %97, %98 : vector<2x8x8xf32>
    %100 = vector.broadcast %49 : vector<2x1x8xf32> to vector<2x8x8xf32>
    %101 = arith.addf %99, %100 : vector<2x8x8xf32>
    %cst_35 = arith.constant dense<0xFF800000> : vector<2x8xf32>
    %102 = vector.multi_reduction <maximumf>, %101, %cst_35 [2] : vector<2x8x8xf32> to vector<2x8xf32>
    %103 = vector.shape_cast %102 : vector<2x8xf32> to vector<2x8x1xf32>
    %104 = vector.broadcast %103 : vector<2x8x1xf32> to vector<2x8x8xf32>
    %105 = arith.subf %101, %104 : vector<2x8x8xf32>
    %106 = math.exp %105 : vector<2x8x8xf32>
    %cst_36 = arith.constant dense<0.000000e+00> : vector<2x8xf32>
    %107 = vector.multi_reduction <add>, %106, %cst_36 [2] : vector<2x8x8xf32> to vector<2x8xf32>
    %108 = vector.shape_cast %107 : vector<2x8xf32> to vector<2x8x1xf32>
    %109 = tpu.reciprocal %108 {approx = true} : vector<2x8x1xf32> -> vector<2x8x1xf32>
    %110 = vector.broadcast %109 : vector<2x8x1xf32> to vector<2x8x8xf32>
    %111 = arith.mulf %106, %110 : vector<2x8x8xf32>
    %112 = arith.truncf %111 : vector<2x8x8xf32> to vector<2x8x8xbf16>
    "tpu.trace_start"() <{level = 10 : i32, message = "bqk,bkd->bqd"}> : () -> ()
    %cst_37 = arith.constant dense<0.000000e+00> : vector<2x8x16xf32>
    %113 = tpu.matmul %112, %96, %cst_37 {dimension_numbers = #tpu.dot_dimension_numbers<[2], [1], [1], [2], [0, 0, 0, 1, 1, 2], [0], [0]>} : vector<2x8x8xbf16>, vector<2x8x16xbf16>, vector<2x8x16xf32> -> vector<2x8x16xf32>
    "tpu.trace_stop"() : () -> ()
    %114 = vector.shape_cast %113 : vector<2x8x16xf32> to vector<16x16xf32>
    %115 = tpu.concatenate %87, %114 in 1 : vector<16x16xf32>, vector<16x16xf32> -> vector<16x32xf32>
    %116 = arith.truncf %115 : vector<16x32xf32> to vector<16x32xbf16>
    %c0_38 = arith.constant 0 : index
    %c0_39 = arith.constant 0 : index
    %c0_40 = arith.constant 0 : index
    %117 = vector.load %arg8[%c0_38, %c0_39, %c0_40] : memref<2x32x32xbf16, #tpu.memory_space<vmem>>, vector<1x32x32xbf16>
    %118 = vector.shape_cast %117 : vector<1x32x32xbf16> to vector<32x32xbf16>
    %cst_41 = arith.constant dense<0.000000e+00> : vector<16x32xf32>
    %119 = tpu.matmul %116, %118, %cst_41 {dimension_numbers = #tpu.dot_dimension_numbers<[1], [0], [0], [1], [0, 0, 1, 1], [], []>} : vector<16x32xbf16>, vector<32x32xbf16>, vector<16x32xf32> -> vector<16x32xf32>
    %c0_42 = arith.constant 0 : index
    %c0_43 = arith.constant 0 : index
    %c0_44 = arith.constant 0 : index
    %120 = vector.load %arg9[%c0_42, %c0_43, %c0_44] : memref<2x1x32xf32, #tpu.memory_space<vmem>>, vector<1x1x32xf32>
    %121 = vector.shape_cast %120 : vector<1x1x32xf32> to vector<1x32xf32>
    %122 = vector.broadcast %121 : vector<1x32xf32> to vector<16x32xf32>
    %123 = arith.addf %119, %122 : vector<16x32xf32>
    %124 = arith.addf %43, %123 : vector<16x32xf32>
    %c0_45 = arith.constant 0 : index
    %c0_46 = arith.constant 0 : index
    %c0_47 = arith.constant 0 : index
    %125 = vector.load %arg10[%c0_45, %c0_46, %c0_47] : memref<2x1x32xf32, #tpu.memory_space<vmem>>, vector<1x1x32xf32>
    %126 = vector.shape_cast %125 : vector<1x1x32xf32> to vector<1x32xf32>
    %c0_48 = arith.constant 0 : index
    %c0_49 = arith.constant 0 : index
    %c0_50 = arith.constant 0 : index
    %127 = vector.load %arg11[%c0_48, %c0_49, %c0_50] : memref<2x1x32xf32, #tpu.memory_space<vmem>>, vector<1x1x32xf32>
    %128 = vector.shape_cast %127 : vector<1x1x32xf32> to vector<1x32xf32>
    %cst_51 = arith.constant dense<0.000000e+00> : vector<16xf32>
    %129 = vector.multi_reduction <add>, %124, %cst_51 [1] : vector<16x32xf32> to vector<16xf32>
    %130 = vector.shape_cast %129 : vector<16xf32> to vector<16x1xf32>
    %cst_52 = arith.constant 3.200000e+01 : f32
    %131 = vector.broadcast %cst_52 : f32 to vector<16x1xf32>
    %132 = arith.divf %130, %131 : vector<16x1xf32>
    %133 = vector.broadcast %132 : vector<16x1xf32> to vector<16x32xf32>
    %134 = arith.subf %124, %133 : vector<16x32xf32>
    %135 = vector.broadcast %132 : vector<16x1xf32> to vector<16x32xf32>
    %136 = arith.subf %124, %135 : vector<16x32xf32>
    %137 = arith.mulf %134, %136 : vector<16x32xf32>
    %cst_53 = arith.constant dense<0.000000e+00> : vector<16xf32>
    %138 = vector.multi_reduction <add>, %137, %cst_53 [1] : vector<16x32xf32> to vector<16xf32>
    %139 = vector.shape_cast %138 : vector<16xf32> to vector<16x1xf32>
    %cst_54 = arith.constant 3.200000e+01 : f32
    %140 = vector.broadcast %cst_54 : f32 to vector<16x1xf32>
    %141 = arith.divf %139, %140 : vector<16x1xf32>
    %142 = vector.broadcast %132 : vector<16x1xf32> to vector<16x32xf32>
    %143 = arith.subf %124, %142 : vector<16x32xf32>
    %cst_55 = arith.constant 9.99999996E-13 : f32
    %144 = vector.broadcast %cst_55 : f32 to vector<16x1xf32>
    %145 = arith.addf %141, %144 : vector<16x1xf32>
    %146 = math.rsqrt %145 : vector<16x1xf32>
    %147 = vector.broadcast %146 : vector<16x1xf32> to vector<16x32xf32>
    %148 = arith.mulf %143, %147 : vector<16x32xf32>
    %149 = vector.broadcast %126 : vector<1x32xf32> to vector<16x32xf32>
    %150 = arith.mulf %148, %149 : vector<16x32xf32>
    %151 = vector.broadcast %128 : vector<1x32xf32> to vector<16x32xf32>
    %152 = arith.addf %150, %151 : vector<16x32xf32>
    %153 = arith.truncf %152 : vector<16x32xf32> to vector<16x32xbf16>
    %c0_56 = arith.constant 0 : index
    %c0_57 = arith.constant 0 : index
    %c0_58 = arith.constant 0 : index
    %154 = vector.load %arg12[%c0_56, %c0_57, %c0_58] : memref<2x32x64xbf16, #tpu.memory_space<vmem>>, vector<1x32x64xbf16>
    %155 = vector.shape_cast %154 : vector<1x32x64xbf16> to vector<32x64xbf16>
    %cst_59 = arith.constant dense<0.000000e+00> : vector<16x64xf32>
    %156 = tpu.matmul %153, %155, %cst_59 {dimension_numbers = #tpu.dot_dimension_numbers<[1], [0], [0], [1], [0, 0, 1, 1], [], []>} : vector<16x32xbf16>, vector<32x64xbf16>, vector<16x64xf32> -> vector<16x64xf32>
    %c0_60 = arith.constant 0 : index
    %c0_61 = arith.constant 0 : index
    %c0_62 = arith.constant 0 : index
    %157 = vector.load %arg13[%c0_60, %c0_61, %c0_62] : memref<2x1x64xf32, #tpu.memory_space<vmem>>, vector<1x1x64xf32>
    %158 = vector.shape_cast %157 : vector<1x1x64xf32> to vector<1x64xf32>
    %159 = vector.broadcast %158 : vector<1x64xf32> to vector<16x64xf32>
    %160 = arith.addf %156, %159 : vector<16x64xf32>
    %161 = arith.mulf %160, %160 : vector<16x64xf32>
    %162 = arith.mulf %160, %161 : vector<16x64xf32>
    %cst_63 = arith.constant 4.471500e-02 : f32
    %163 = vector.broadcast %cst_63 : f32 to vector<16x64xf32>
    %164 = arith.mulf %163, %162 : vector<16x64xf32>
    %165 = arith.addf %160, %164 : vector<16x64xf32>
    %cst_64 = arith.constant 0.797884583 : f32
    %166 = vector.broadcast %cst_64 : f32 to vector<16x64xf32>
    %167 = arith.mulf %166, %165 : vector<16x64xf32>
    %168 = math.tanh %167 : vector<16x64xf32>
    %cst_65 = arith.constant 1.000000e+00 : f32
    %169 = vector.broadcast %cst_65 : f32 to vector<16x64xf32>
    %170 = arith.addf %169, %168 : vector<16x64xf32>
    %cst_66 = arith.constant 5.000000e-01 : f32
    %171 = vector.broadcast %cst_66 : f32 to vector<16x64xf32>
    %172 = arith.mulf %171, %170 : vector<16x64xf32>
    %173 = arith.mulf %160, %172 : vector<16x64xf32>
    %174 = arith.truncf %173 : vector<16x64xf32> to vector<16x64xbf16>
    %c0_67 = arith.constant 0 : index
    %c0_68 = arith.constant 0 : index
    %c0_69 = arith.constant 0 : index
    %175 = vector.load %arg14[%c0_67, %c0_68, %c0_69] : memref<2x64x32xbf16, #tpu.memory_space<vmem>>, vector<1x64x32xbf16>
    %176 = vector.shape_cast %175 : vector<1x64x32xbf16> to vector<64x32xbf16>
    %cst_70 = arith.constant dense<0.000000e+00> : vector<16x32xf32>
    %177 = tpu.matmul %174, %176, %cst_70 {dimension_numbers = #tpu.dot_dimension_numbers<[1], [0], [0], [1], [0, 0, 1, 1], [], []>} : vector<16x64xbf16>, vector<64x32xbf16>, vector<16x32xf32> -> vector<16x32xf32>
    %c0_71 = arith.constant 0 : index
    %c0_72 = arith.constant 0 : index
    %c0_73 = arith.constant 0 : index
    %178 = vector.load %arg15[%c0_71, %c0_72, %c0_73] : memref<2x1x32xf32, #tpu.memory_space<vmem>>, vector<1x1x32xf32>
    %179 = vector.shape_cast %178 : vector<1x1x32xf32> to vector<1x32xf32>
    %180 = vector.broadcast %179 : vector<1x32xf32> to vector<16x32xf32>
    %181 = arith.addf %177, %180 : vector<16x32xf32>
    %182 = arith.addf %152, %181 : vector<16x32xf32>
    %c0_74 = arith.constant 0 : index
    %c0_75 = arith.constant 0 : index
    %c0_76 = arith.constant 0 : index
    %183 = vector.load %arg16[%c0_74, %c0_75, %c0_76] : memref<2x1x32xf32, #tpu.memory_space<vmem>>, vector<1x1x32xf32>
    %184 = vector.shape_cast %183 : vector<1x1x32xf32> to vector<1x32xf32>
    %c0_77 = arith.constant 0 : index
    %c0_78 = arith.constant 0 : index
    %c0_79 = arith.constant 0 : index
    %185 = vector.load %arg17[%c0_77, %c0_78, %c0_79] : memref<2x1x32xf32, #tpu.memory_space<vmem>>, vector<1x1x32xf32>
    %186 = vector.shape_cast %185 : vector<1x1x32xf32> to vector<1x32xf32>
    %cst_80 = arith.constant dense<0.000000e+00> : vector<16xf32>
    %187 = vector.multi_reduction <add>, %182, %cst_80 [1] : vector<16x32xf32> to vector<16xf32>
    %188 = vector.shape_cast %187 : vector<16xf32> to vector<16x1xf32>
    %cst_81 = arith.constant 3.200000e+01 : f32
    %189 = vector.broadcast %cst_81 : f32 to vector<16x1xf32>
    %190 = arith.divf %188, %189 : vector<16x1xf32>
    %191 = vector.broadcast %190 : vector<16x1xf32> to vector<16x32xf32>
    %192 = arith.subf %182, %191 : vector<16x32xf32>
    %193 = vector.broadcast %190 : vector<16x1xf32> to vector<16x32xf32>
    %194 = arith.subf %182, %193 : vector<16x32xf32>
    %195 = arith.mulf %192, %194 : vector<16x32xf32>
    %cst_82 = arith.constant dense<0.000000e+00> : vector<16xf32>
    %196 = vector.multi_reduction <add>, %195, %cst_82 [1] : vector<16x32xf32> to vector<16xf32>
    %197 = vector.shape_cast %196 : vector<16xf32> to vector<16x1xf32>
    %cst_83 = arith.constant 3.200000e+01 : f32
    %198 = vector.broadcast %cst_83 : f32 to vector<16x1xf32>
    %199 = arith.divf %197, %198 : vector<16x1xf32>
    %200 = vector.broadcast %190 : vector<16x1xf32> to vector<16x32xf32>
    %201 = arith.subf %182, %200 : vector<16x32xf32>
    %cst_84 = arith.constant 9.99999996E-13 : f32
    %202 = vector.broadcast %cst_84 : f32 to vector<16x1xf32>
    %203 = arith.addf %199, %202 : vector<16x1xf32>
    %204 = math.rsqrt %203 : vector<16x1xf32>
    %205 = vector.broadcast %204 : vector<16x1xf32> to vector<16x32xf32>
    %206 = arith.mulf %201, %205 : vector<16x32xf32>
    %207 = vector.broadcast %184 : vector<1x32xf32> to vector<16x32xf32>
    %208 = arith.mulf %206, %207 : vector<16x32xf32>
    %209 = vector.broadcast %186 : vector<1x32xf32> to vector<16x32xf32>
    %210 = arith.addf %208, %209 : vector<16x32xf32>
    %211 = arith.truncf %210 : vector<16x32xf32> to vector<16x32xbf16>
    %c1 = arith.constant 1 : index
    %c0_85 = arith.constant 0 : index
    %c0_86 = arith.constant 0 : index
    %212 = vector.load %arg6[%c1, %c0_85, %c0_86] : memref<2x32x128xbf16, #tpu.memory_space<vmem>>, vector<1x32x128xbf16>
    %213 = vector.shape_cast %212 : vector<1x32x128xbf16> to vector<32x128xbf16>
    %cst_87 = arith.constant dense<0.000000e+00> : vector<16x128xf32>
    %214 = tpu.matmul %211, %213, %cst_87 {dimension_numbers = #tpu.dot_dimension_numbers<[1], [0], [0], [1], [0, 0, 1, 1], [], []>} : vector<16x32xbf16>, vector<32x128xbf16>, vector<16x128xf32> -> vector<16x128xf32>
    %c1_88 = arith.constant 1 : index
    %c0_89 = arith.constant 0 : index
    %c0_90 = arith.constant 0 : index
    %215 = vector.load %arg7[%c1_88, %c0_89, %c0_90] : memref<2x1x128xf32, #tpu.memory_space<vmem>>, vector<1x1x128xf32>
    %216 = vector.shape_cast %215 : vector<1x1x128xf32> to vector<1x128xf32>
    %217 = vector.broadcast %216 : vector<1x128xf32> to vector<16x128xf32>
    %218 = arith.addf %214, %217 : vector<16x128xf32>
    %219 = vector.extract_strided_slice %218 {offsets = [0, 0], sizes = [16, 32], strides = [1, 1]} : vector<16x128xf32> to vector<16x32xf32>
    %220 = vector.extract_strided_slice %218 {offsets = [0, 32], sizes = [16, 32], strides = [1, 1]} : vector<16x128xf32> to vector<16x32xf32>
    %221 = vector.extract_strided_slice %218 {offsets = [0, 64], sizes = [16, 32], strides = [1, 1]} : vector<16x128xf32> to vector<16x32xf32>
    %222 = vector.extract_strided_slice %219 {offsets = [0, 0], sizes = [16, 16], strides = [1, 1]} : vector<16x32xf32> to vector<16x16xf32>
    %223 = vector.shape_cast %222 : vector<16x16xf32> to vector<2x8x16xf32>
    %224 = arith.truncf %223 : vector<2x8x16xf32> to vector<2x8x16xbf16>
    %225 = vector.extract_strided_slice %220 {offsets = [0, 0], sizes = [16, 16], strides = [1, 1]} : vector<16x32xf32> to vector<16x16xf32>
    %226 = vector.shape_cast %225 : vector<16x16xf32> to vector<2x8x16xf32>
    %227 = arith.truncf %226 : vector<2x8x16xf32> to vector<2x8x16xbf16>
    %228 = vector.extract_strided_slice %221 {offsets = [0, 0], sizes = [16, 16], strides = [1, 1]} : vector<16x32xf32> to vector<16x16xf32>
    %229 = vector.shape_cast %228 : vector<16x16xf32> to vector<2x8x16xf32>
    %230 = arith.truncf %229 : vector<2x8x16xf32> to vector<2x8x16xbf16>
    "tpu.trace_start"() <{level = 10 : i32, message = "bqd,bkd->bqk"}> : () -> ()
    %cst_91 = arith.constant dense<0.000000e+00> : vector<2x8x8xf32>
    %231 = tpu.matmul %224, %227, %cst_91 {dimension_numbers = #tpu.dot_dimension_numbers<[2], [2], [1], [1], [0, 0, 0, 1, 1, 1], [0], [0]>} : vector<2x8x16xbf16>, vector<2x8x16xbf16>, vector<2x8x8xf32> -> vector<2x8x8xf32>
    "tpu.trace_stop"() : () -> ()
    %cst_92 = arith.constant 2.500000e-01 : f32
    %232 = vector.broadcast %cst_92 : f32 to vector<2x8x8xf32>
    %233 = arith.mulf %231, %232 : vector<2x8x8xf32>
    %234 = vector.broadcast %49 : vector<2x1x8xf32> to vector<2x8x8xf32>
    %235 = arith.addf %233, %234 : vector<2x8x8xf32>
    %cst_93 = arith.constant dense<0xFF800000> : vector<2x8xf32>
    %236 = vector.multi_reduction <maximumf>, %235, %cst_93 [2] : vector<2x8x8xf32> to vector<2x8xf32>
    %237 = vector.shape_cast %236 : vector<2x8xf32> to vector<2x8x1xf32>
    %238 = vector.broadcast %237 : vector<2x8x1xf32> to vector<2x8x8xf32>
    %239 = arith.subf %235, %238 : vector<2x8x8xf32>
    %240 = math.exp %239 : vector<2x8x8xf32>
    %cst_94 = arith.constant dense<0.000000e+00> : vector<2x8xf32>
    %241 = vector.multi_reduction <add>, %240, %cst_94 [2] : vector<2x8x8xf32> to vector<2x8xf32>
    %242 = vector.shape_cast %241 : vector<2x8xf32> to vector<2x8x1xf32>
    %243 = tpu.reciprocal %242 {approx = true} : vector<2x8x1xf32> -> vector<2x8x1xf32>
    %244 = vector.broadcast %243 : vector<2x8x1xf32> to vector<2x8x8xf32>
    %245 = arith.mulf %240, %244 : vector<2x8x8xf32>
    %246 = arith.truncf %245 : vector<2x8x8xf32> to vector<2x8x8xbf16>
    "tpu.trace_start"() <{level = 10 : i32, message = "bqk,bkd->bqd"}> : () -> ()
    %cst_95 = arith.constant dense<0.000000e+00> : vector<2x8x16xf32>
    %247 = tpu.matmul %246, %230, %cst_95 {dimension_numbers = #tpu.dot_dimension_numbers<[2], [1], [1], [2], [0, 0, 0, 1, 1, 2], [0], [0]>} : vector<2x8x8xbf16>, vector<2x8x16xbf16>, vector<2x8x16xf32> -> vector<2x8x16xf32>
    "tpu.trace_stop"() : () -> ()
    %248 = vector.shape_cast %247 : vector<2x8x16xf32> to vector<16x16xf32>
    %249 = vector.extract_strided_slice %219 {offsets = [0, 16], sizes = [16, 16], strides = [1, 1]} : vector<16x32xf32> to vector<16x16xf32>
    %250 = vector.shape_cast %249 : vector<16x16xf32> to vector<2x8x16xf32>
    %251 = arith.truncf %250 : vector<2x8x16xf32> to vector<2x8x16xbf16>
    %252 = vector.extract_strided_slice %220 {offsets = [0, 16], sizes = [16, 16], strides = [1, 1]} : vector<16x32xf32> to vector<16x16xf32>
    %253 = vector.shape_cast %252 : vector<16x16xf32> to vector<2x8x16xf32>
    %254 = arith.truncf %253 : vector<2x8x16xf32> to vector<2x8x16xbf16>
    %255 = vector.extract_strided_slice %221 {offsets = [0, 16], sizes = [16, 16], strides = [1, 1]} : vector<16x32xf32> to vector<16x16xf32>
    %256 = vector.shape_cast %255 : vector<16x16xf32> to vector<2x8x16xf32>
    %257 = arith.truncf %256 : vector<2x8x16xf32> to vector<2x8x16xbf16>
    "tpu.trace_start"() <{level = 10 : i32, message = "bqd,bkd->bqk"}> : () -> ()
    %cst_96 = arith.constant dense<0.000000e+00> : vector<2x8x8xf32>
    %258 = tpu.matmul %251, %254, %cst_96 {dimension_numbers = #tpu.dot_dimension_numbers<[2], [2], [1], [1], [0, 0, 0, 1, 1, 1], [0], [0]>} : vector<2x8x16xbf16>, vector<2x8x16xbf16>, vector<2x8x8xf32> -> vector<2x8x8xf32>
    "tpu.trace_stop"() : () -> ()
    %cst_97 = arith.constant 2.500000e-01 : f32
    %259 = vector.broadcast %cst_97 : f32 to vector<2x8x8xf32>
    %260 = arith.mulf %258, %259 : vector<2x8x8xf32>
    %261 = vector.broadcast %49 : vector<2x1x8xf32> to vector<2x8x8xf32>
    %262 = arith.addf %260, %261 : vector<2x8x8xf32>
    %cst_98 = arith.constant dense<0xFF800000> : vector<2x8xf32>
    %263 = vector.multi_reduction <maximumf>, %262, %cst_98 [2] : vector<2x8x8xf32> to vector<2x8xf32>
    %264 = vector.shape_cast %263 : vector<2x8xf32> to vector<2x8x1xf32>
    %265 = vector.broadcast %264 : vector<2x8x1xf32> to vector<2x8x8xf32>
    %266 = arith.subf %262, %265 : vector<2x8x8xf32>
    %267 = math.exp %266 : vector<2x8x8xf32>
    %cst_99 = arith.constant dense<0.000000e+00> : vector<2x8xf32>
    %268 = vector.multi_reduction <add>, %267, %cst_99 [2] : vector<2x8x8xf32> to vector<2x8xf32>
    %269 = vector.shape_cast %268 : vector<2x8xf32> to vector<2x8x1xf32>
    %270 = tpu.reciprocal %269 {approx = true} : vector<2x8x1xf32> -> vector<2x8x1xf32>
    %271 = vector.broadcast %270 : vector<2x8x1xf32> to vector<2x8x8xf32>
    %272 = arith.mulf %267, %271 : vector<2x8x8xf32>
    %273 = arith.truncf %272 : vector<2x8x8xf32> to vector<2x8x8xbf16>
    "tpu.trace_start"() <{level = 10 : i32, message = "bqk,bkd->bqd"}> : () -> ()
    %cst_100 = arith.constant dense<0.000000e+00> : vector<2x8x16xf32>
    %274 = tpu.matmul %273, %257, %cst_100 {dimension_numbers = #tpu.dot_dimension_numbers<[2], [1], [1], [2], [0, 0, 0, 1, 1, 2], [0], [0]>} : vector<2x8x8xbf16>, vector<2x8x16xbf16>, vector<2x8x16xf32> -> vector<2x8x16xf32>
    "tpu.trace_stop"() : () -> ()
    %275 = vector.shape_cast %274 : vector<2x8x16xf32> to vector<16x16xf32>
    %276 = tpu.concatenate %248, %275 in 1 : vector<16x16xf32>, vector<16x16xf32> -> vector<16x32xf32>
    %277 = arith.truncf %276 : vector<16x32xf32> to vector<16x32xbf16>
    %c1_101 = arith.constant 1 : index
    %c0_102 = arith.constant 0 : index
    %c0_103 = arith.constant 0 : index
    %278 = vector.load %arg8[%c1_101, %c0_102, %c0_103] : memref<2x32x32xbf16, #tpu.memory_space<vmem>>, vector<1x32x32xbf16>
    %279 = vector.shape_cast %278 : vector<1x32x32xbf16> to vector<32x32xbf16>
    %cst_104 = arith.constant dense<0.000000e+00> : vector<16x32xf32>
    %280 = tpu.matmul %277, %279, %cst_104 {dimension_numbers = #tpu.dot_dimension_numbers<[1], [0], [0], [1], [0, 0, 1, 1], [], []>} : vector<16x32xbf16>, vector<32x32xbf16>, vector<16x32xf32> -> vector<16x32xf32>
    %c1_105 = arith.constant 1 : index
    %c0_106 = arith.constant 0 : index
    %c0_107 = arith.constant 0 : index
    %281 = vector.load %arg9[%c1_105, %c0_106, %c0_107] : memref<2x1x32xf32, #tpu.memory_space<vmem>>, vector<1x1x32xf32>
    %282 = vector.shape_cast %281 : vector<1x1x32xf32> to vector<1x32xf32>
    %283 = vector.broadcast %282 : vector<1x32xf32> to vector<16x32xf32>
    %284 = arith.addf %280, %283 : vector<16x32xf32>
    %285 = arith.addf %210, %284 : vector<16x32xf32>
    %c1_108 = arith.constant 1 : index
    %c0_109 = arith.constant 0 : index
    %c0_110 = arith.constant 0 : index
    %286 = vector.load %arg10[%c1_108, %c0_109, %c0_110] : memref<2x1x32xf32, #tpu.memory_space<vmem>>, vector<1x1x32xf32>
    %287 = vector.shape_cast %286 : vector<1x1x32xf32> to vector<1x32xf32>
    %c1_111 = arith.constant 1 : index
    %c0_112 = arith.constant 0 : index
    %c0_113 = arith.constant 0 : index
    %288 = vector.load %arg11[%c1_111, %c0_112, %c0_113] : memref<2x1x32xf32, #tpu.memory_space<vmem>>, vector<1x1x32xf32>
    %289 = vector.shape_cast %288 : vector<1x1x32xf32> to vector<1x32xf32>
    %cst_114 = arith.constant dense<0.000000e+00> : vector<16xf32>
    %290 = vector.multi_reduction <add>, %285, %cst_114 [1] : vector<16x32xf32> to vector<16xf32>
    %291 = vector.shape_cast %290 : vector<16xf32> to vector<16x1xf32>
    %cst_115 = arith.constant 3.200000e+01 : f32
    %292 = vector.broadcast %cst_115 : f32 to vector<16x1xf32>
    %293 = arith.divf %291, %292 : vector<16x1xf32>
    %294 = vector.broadcast %293 : vector<16x1xf32> to vector<16x32xf32>
    %295 = arith.subf %285, %294 : vector<16x32xf32>
    %296 = vector.broadcast %293 : vector<16x1xf32> to vector<16x32xf32>
    %297 = arith.subf %285, %296 : vector<16x32xf32>
    %298 = arith.mulf %295, %297 : vector<16x32xf32>
    %cst_116 = arith.constant dense<0.000000e+00> : vector<16xf32>
    %299 = vector.multi_reduction <add>, %298, %cst_116 [1] : vector<16x32xf32> to vector<16xf32>
    %300 = vector.shape_cast %299 : vector<16xf32> to vector<16x1xf32>
    %cst_117 = arith.constant 3.200000e+01 : f32
    %301 = vector.broadcast %cst_117 : f32 to vector<16x1xf32>
    %302 = arith.divf %300, %301 : vector<16x1xf32>
    %303 = vector.broadcast %293 : vector<16x1xf32> to vector<16x32xf32>
    %304 = arith.subf %285, %303 : vector<16x32xf32>
    %cst_118 = arith.constant 9.99999996E-13 : f32
    %305 = vector.broadcast %cst_118 : f32 to vector<16x1xf32>
    %306 = arith.addf %302, %305 : vector<16x1xf32>
    %307 = math.rsqrt %306 : vector<16x1xf32>
    %308 = vector.broadcast %307 : vector<16x1xf32> to vector<16x32xf32>
    %309 = arith.mulf %304, %308 : vector<16x32xf32>
    %310 = vector.broadcast %287 : vector<1x32xf32> to vector<16x32xf32>
    %311 = arith.mulf %309, %310 : vector<16x32xf32>
    %312 = vector.broadcast %289 : vector<1x32xf32> to vector<16x32xf32>
    %313 = arith.addf %311, %312 : vector<16x32xf32>
    %314 = arith.truncf %313 : vector<16x32xf32> to vector<16x32xbf16>
    %c1_119 = arith.constant 1 : index
    %c0_120 = arith.constant 0 : index
    %c0_121 = arith.constant 0 : index
    %315 = vector.load %arg12[%c1_119, %c0_120, %c0_121] : memref<2x32x64xbf16, #tpu.memory_space<vmem>>, vector<1x32x64xbf16>
    %316 = vector.shape_cast %315 : vector<1x32x64xbf16> to vector<32x64xbf16>
    %cst_122 = arith.constant dense<0.000000e+00> : vector<16x64xf32>
    %317 = tpu.matmul %314, %316, %cst_122 {dimension_numbers = #tpu.dot_dimension_numbers<[1], [0], [0], [1], [0, 0, 1, 1], [], []>} : vector<16x32xbf16>, vector<32x64xbf16>, vector<16x64xf32> -> vector<16x64xf32>
    %c1_123 = arith.constant 1 : index
    %c0_124 = arith.constant 0 : index
    %c0_125 = arith.constant 0 : index
    %318 = vector.load %arg13[%c1_123, %c0_124, %c0_125] : memref<2x1x64xf32, #tpu.memory_space<vmem>>, vector<1x1x64xf32>
    %319 = vector.shape_cast %318 : vector<1x1x64xf32> to vector<1x64xf32>
    %320 = vector.broadcast %319 : vector<1x64xf32> to vector<16x64xf32>
    %321 = arith.addf %317, %320 : vector<16x64xf32>
    %322 = arith.mulf %321, %321 : vector<16x64xf32>
    %323 = arith.mulf %321, %322 : vector<16x64xf32>
    %cst_126 = arith.constant 4.471500e-02 : f32
    %324 = vector.broadcast %cst_126 : f32 to vector<16x64xf32>
    %325 = arith.mulf %324, %323 : vector<16x64xf32>
    %326 = arith.addf %321, %325 : vector<16x64xf32>
    %cst_127 = arith.constant 0.797884583 : f32
    %327 = vector.broadcast %cst_127 : f32 to vector<16x64xf32>
    %328 = arith.mulf %327, %326 : vector<16x64xf32>
    %329 = math.tanh %328 : vector<16x64xf32>
    %cst_128 = arith.constant 1.000000e+00 : f32
    %330 = vector.broadcast %cst_128 : f32 to vector<16x64xf32>
    %331 = arith.addf %330, %329 : vector<16x64xf32>
    %cst_129 = arith.constant 5.000000e-01 : f32
    %332 = vector.broadcast %cst_129 : f32 to vector<16x64xf32>
    %333 = arith.mulf %332, %331 : vector<16x64xf32>
    %334 = arith.mulf %321, %333 : vector<16x64xf32>
    %335 = arith.truncf %334 : vector<16x64xf32> to vector<16x64xbf16>
    %c1_130 = arith.constant 1 : index
    %c0_131 = arith.constant 0 : index
    %c0_132 = arith.constant 0 : index
    %336 = vector.load %arg14[%c1_130, %c0_131, %c0_132] : memref<2x64x32xbf16, #tpu.memory_space<vmem>>, vector<1x64x32xbf16>
    %337 = vector.shape_cast %336 : vector<1x64x32xbf16> to vector<64x32xbf16>
    %cst_133 = arith.constant dense<0.000000e+00> : vector<16x32xf32>
    %338 = tpu.matmul %335, %337, %cst_133 {dimension_numbers = #tpu.dot_dimension_numbers<[1], [0], [0], [1], [0, 0, 1, 1], [], []>} : vector<16x64xbf16>, vector<64x32xbf16>, vector<16x32xf32> -> vector<16x32xf32>
    %c1_134 = arith.constant 1 : index
    %c0_135 = arith.constant 0 : index
    %c0_136 = arith.constant 0 : index
    %339 = vector.load %arg15[%c1_134, %c0_135, %c0_136] : memref<2x1x32xf32, #tpu.memory_space<vmem>>, vector<1x1x32xf32>
    %340 = vector.shape_cast %339 : vector<1x1x32xf32> to vector<1x32xf32>
    %341 = vector.broadcast %340 : vector<1x32xf32> to vector<16x32xf32>
    %342 = arith.addf %338, %341 : vector<16x32xf32>
    %343 = arith.addf %313, %342 : vector<16x32xf32>
    %c1_137 = arith.constant 1 : index
    %c0_138 = arith.constant 0 : index
    %c0_139 = arith.constant 0 : index
    %344 = vector.load %arg16[%c1_137, %c0_138, %c0_139] : memref<2x1x32xf32, #tpu.memory_space<vmem>>, vector<1x1x32xf32>
    %345 = vector.shape_cast %344 : vector<1x1x32xf32> to vector<1x32xf32>
    %c1_140 = arith.constant 1 : index
    %c0_141 = arith.constant 0 : index
    %c0_142 = arith.constant 0 : index
    %346 = vector.load %arg17[%c1_140, %c0_141, %c0_142] : memref<2x1x32xf32, #tpu.memory_space<vmem>>, vector<1x1x32xf32>
    %347 = vector.shape_cast %346 : vector<1x1x32xf32> to vector<1x32xf32>
    %cst_143 = arith.constant dense<0.000000e+00> : vector<16xf32>
    %348 = vector.multi_reduction <add>, %343, %cst_143 [1] : vector<16x32xf32> to vector<16xf32>
    %349 = vector.shape_cast %348 : vector<16xf32> to vector<16x1xf32>
    %cst_144 = arith.constant 3.200000e+01 : f32
    %350 = vector.broadcast %cst_144 : f32 to vector<16x1xf32>
    %351 = arith.divf %349, %350 : vector<16x1xf32>
    %352 = vector.broadcast %351 : vector<16x1xf32> to vector<16x32xf32>
    %353 = arith.subf %343, %352 : vector<16x32xf32>
    %354 = vector.broadcast %351 : vector<16x1xf32> to vector<16x32xf32>
    %355 = arith.subf %343, %354 : vector<16x32xf32>
    %356 = arith.mulf %353, %355 : vector<16x32xf32>
    %cst_145 = arith.constant dense<0.000000e+00> : vector<16xf32>
    %357 = vector.multi_reduction <add>, %356, %cst_145 [1] : vector<16x32xf32> to vector<16xf32>
    %358 = vector.shape_cast %357 : vector<16xf32> to vector<16x1xf32>
    %cst_146 = arith.constant 3.200000e+01 : f32
    %359 = vector.broadcast %cst_146 : f32 to vector<16x1xf32>
    %360 = arith.divf %358, %359 : vector<16x1xf32>
    %361 = vector.broadcast %351 : vector<16x1xf32> to vector<16x32xf32>
    %362 = arith.subf %343, %361 : vector<16x32xf32>
    %cst_147 = arith.constant 9.99999996E-13 : f32
    %363 = vector.broadcast %cst_147 : f32 to vector<16x1xf32>
    %364 = arith.addf %360, %363 : vector<16x1xf32>
    %365 = math.rsqrt %364 : vector<16x1xf32>
    %366 = vector.broadcast %365 : vector<16x1xf32> to vector<16x32xf32>
    %367 = arith.mulf %362, %366 : vector<16x32xf32>
    %368 = vector.broadcast %345 : vector<1x32xf32> to vector<16x32xf32>
    %369 = arith.mulf %367, %368 : vector<16x32xf32>
    %370 = vector.broadcast %347 : vector<1x32xf32> to vector<16x32xf32>
    %371 = arith.addf %369, %370 : vector<16x32xf32>
    %372 = vector.shape_cast %371 : vector<16x32xf32> to vector<2x8x32xf32>
    %373 = vector.extract_strided_slice %372 {offsets = [0, 0, 0], sizes = [2, 1, 32], strides = [1, 1, 1]} : vector<2x8x32xf32> to vector<2x1x32xf32>
    %374 = vector.shape_cast %373 : vector<2x1x32xf32> to vector<2x32xf32>
    %375 = arith.truncf %374 : vector<2x32xf32> to vector<2x32xbf16>
    %c0_148 = arith.constant 0 : index
    %c0_149 = arith.constant 0 : index
    %376 = vector.load %arg18[%c0_148, %c0_149] : memref<32x128xbf16, #tpu.memory_space<vmem>>, vector<32x128xbf16>
    %cst_150 = arith.constant dense<0.000000e+00> : vector<2x128xf32>
    %377 = tpu.matmul %375, %376, %cst_150 {dimension_numbers = #tpu.dot_dimension_numbers<[1], [0], [0], [1], [0, 0, 1, 1], [], []>} : vector<2x32xbf16>, vector<32x128xbf16>, vector<2x128xf32> -> vector<2x128xf32>
    %c0_151 = arith.constant 0 : index
    %c0_152 = arith.constant 0 : index
    %378 = vector.load %arg19[%c0_151, %c0_152] : memref<1x128xf32, #tpu.memory_space<vmem>>, vector<1x128xf32>
    %379 = vector.broadcast %378 : vector<1x128xf32> to vector<2x128xf32>
    %380 = arith.addf %377, %379 : vector<2x128xf32>
    %381 = arith.mulf %380, %380 : vector<2x128xf32>
    %cst_153 = arith.constant dense<0.000000e+00> : vector<2xf32>
    %382 = vector.multi_reduction <add>, %381, %cst_153 [1] : vector<2x128xf32> to vector<2xf32>
    %383 = vector.shape_cast %382 : vector<2xf32> to vector<2x1xf32>
    %cst_154 = arith.constant 1.000000e-24 : f32
    %384 = vector.broadcast %cst_154 : f32 to vector<2x1xf32>
    %385 = arith.maximumf %383, %384 : vector<2x1xf32>
    %386 = math.rsqrt %385 : vector<2x1xf32>
    %387 = vector.broadcast %386 : vector<2x1xf32> to vector<2x128xf32>
    %388 = arith.mulf %380, %387 : vector<2x128xf32>
    %c0_155 = arith.constant 0 : index
    %c0_156 = arith.constant 0 : index
    %389 = vector.load %arg20[%c0_155, %c0_156] : memref<2x128xf32, #tpu.memory_space<vmem>>, vector<2x128xf32>
    tpu.vector_store %arg20[%c0_155, %c0_156], %388 {strides = array<i32>} : memref<2x128xf32, #tpu.memory_space<vmem>>, vector<2x128xf32>,
    return
  }
}

</mosaic_0001>

<llo_original>
// kernel: student_forward.1
$region0: #{student_forward.1}
  #allocation0 [shape = 'u32[]', space=smem, size = 0x4, offset = 0x4, fixed_abs, tag = 'smem constant byte address 0x4 - core index']
  #allocation1 [shape = 'u32[144,128]{1,0:T(1,128)}', space=vmem, size = 0x12000, scoped, tag = 'internal scratch']
  %s0 = inlined_call_operand.vmem [shape: s32[16,1], index: 0, kind: input, shape index: {}]
  %s1 = inlined_call_operand.vmem [shape: s32[2,1,8], index: 1, kind: input, shape index: {}]
  %s2 = inlined_call_operand.vmem [shape: bf16[128,32], index: 2, kind: input, shape index: {}]
  %s3 = inlined_call_operand.vmem [shape: f32[8,32], index: 3, kind: input, shape index: {}]
  %s4 = inlined_call_operand.vmem [shape: f32[1,32], index: 4, kind: input, shape index: {}]
  %s5 = inlined_call_operand.vmem [shape: f32[1,32], index: 5, kind: input, shape index: {}]
  %s6 = inlined_call_operand.vmem [shape: bf16[2,32,128], index: 6, kind: input, shape index: {}]
  %s7 = inlined_call_operand.vmem [shape: f32[2,1,128], index: 7, kind: input, shape index: {}]
  %s8 = inlined_call_operand.vmem [shape: bf16[2,32,32], index: 8, kind: input, shape index: {}]
  %s9 = inlined_call_operand.vmem [shape: f32[2,1,32], index: 9, kind: input, shape index: {}]
  %s10 = inlined_call_operand.vmem [shape: f32[2,1,32], index: 10, kind: input, shape index: {}]
  %s11 = inlined_call_operand.vmem [shape: f32[2,1,32], index: 11, kind: input, shape index: {}]
  %s12 = inlined_call_operand.vmem [shape: bf16[2,32,64], index: 12, kind: input, shape index: {}]
  %s13 = inlined_call_operand.vmem [shape: f32[2,1,64], index: 13, kind: input, shape index: {}]
  %s14 = inlined_call_operand.vmem [shape: bf16[2,64,32], index: 14, kind: input, shape index: {}]
  %s15 = inlined_call_operand.vmem [shape: f32[2,1,32], index: 15, kind: input, shape index: {}]
  %s16 = inlined_call_operand.vmem [shape: f32[2,1,32], index: 16, kind: input, shape index: {}]
  %s17 = inlined_call_operand.vmem [shape: f32[2,1,32], index: 17, kind: input, shape index: {}]
  %s18 = inlined_call_operand.vmem [shape: bf16[32,128], index: 18, kind: input, shape index: {}]
  %s19 = inlined_call_operand.vmem [shape: f32[1,128], index: 19, kind: input, shape index: {}]
  %s20 = inlined_call_operand.hbm [shape: f32[2,128], index: 20, kind: output, shape index: {}]
  %s21 = sld [smem:[#allocation0]]
  $region90: #{student_forward.1} parent=0
    _
  %s23 = ssub.s32 1, %s21
  %s24 = scalar_select 0, %s23, %s21
  $region1: #{student_forward.1} parent=0
    #allocation2 [shape = 'u8[1024]{0}', space=vmem, size = 0x400, scoped, tag = 'output window, operand 0, single buffered']
    #allocation3 [shape = 's32[1]{0}', space=sflag, size = 0x4, scoped, tag = 'scoped memory for student_forward.1']
    %25 = vsyncpa [#allocation3], 0
    // Predicated region
    $region2: #{student_forward.1} parent=1 // pred_check
      _
    $region3: #{student_forward.1} parent=1 // pred_check_branch
      %27 = sbr.rel (0) target = $region5
    $region4: #{student_forward.1} parent=1 // pred_region
      _
    $region5: #{student_forward.1} parent=1 // pred_fallthru
      _
    // Predicated region
    $region6: #{student_forward.1} parent=1 // pred_check
      _
    $region7: #{student_forward.1} parent=1 // pred_check_branch
      %29 = sbr.rel (0) target = $region9
    $region8: #{student_forward.1} parent=1 // pred_region
      _
    $region9: #{student_forward.1} parent=1 // pred_fallthru
      _
    // Predicated region
    $region10: #{student_forward.1} parent=1 // pred_check
      _
    $region11: #{student_forward.1} parent=1 // pred_check_branch
      %31 = sbr.rel (0) target = $region13
    $region12: #{student_forward.1} parent=1 // pred_region
      _
    $region13: #{student_forward.1} parent=1 // pred_fallthru
      _
    // Predicated region
    $region14: #{student_forward.1} parent=1 // pred_check
      _
    $region15: #{student_forward.1} parent=1 // pred_check_branch
      %33 = sbr.rel (0) target = $region17
    $region16: #{student_forward.1} parent=1 // pred_region
      _
    $region17: #{student_forward.1} parent=1 // pred_fallthru
      _
    // Predicated region
    $region18: #{student_forward.1} parent=1 // pred_check
      _
    $region19: #{student_forward.1} parent=1 // pred_check_branch
      %35 = sbr.rel (0) target = $region21
    $region20: #{student_forward.1} parent=1 // pred_region
      _
    $region21: #{student_forward.1} parent=1 // pred_fallthru
      _
    // Predicated region
    $region22: #{student_forward.1} parent=1 // pred_check
      _
    $region23: #{student_forward.1} parent=1 // pred_check_branch
      %37 = sbr.rel (0) target = $region25
    $region24: #{student_forward.1} parent=1 // pred_region
      _
    $region25: #{student_forward.1} parent=1 // pred_fallthru
      _
    // Predicated region
    $region26: #{student_forward.1} parent=1 // pred_check
      _
    $region27: #{student_forward.1} parent=1 // pred_check_branch
      %39 = sbr.rel (0) target = $region29
    $region28: #{student_forward.1} parent=1 // pred_region
      _
    $region29: #{student_forward.1} parent=1 // pred_fallthru
      _
    // Predicated region
    $region30: #{student_forward.1} parent=1 // pred_check
      _
    $region31: #{student_forward.1} parent=1 // pred_check_branch
      %41 = sbr.rel (0) target = $region33
    $region32: #{student_forward.1} parent=1 // pred_region
      _
    $region33: #{student_forward.1} parent=1 // pred_fallthru
      _
    // Predicated region
    $region34: #{student_forward.1} parent=1 // pred_check
      _
    $region35: #{student_forward.1} parent=1 // pred_check_branch
      %43 = sbr.rel (0) target = $region37
    $region36: #{student_forward.1} parent=1 // pred_region
      _
    $region37: #{student_forward.1} parent=1 // pred_fallthru
      _
    // Predicated region
    $region38: #{student_forward.1} parent=1 // pred_check
      _
    $region39: #{student_forward.1} parent=1 // pred_check_branch
      %45 = sbr.rel (0) target = $region41
    $region40: #{student_forward.1} parent=1 // pred_region
      _
    $region41: #{student_forward.1} parent=1 // pred_fallthru
      _
    // Predicated region
    $region42: #{student_forward.1} parent=1 // pred_check
      _
    $region43: #{student_forward.1} parent=1 // pred_check_branch
      %47 = sbr.rel (0) target = $region45
    $region44: #{student_forward.1} parent=1 // pred_region
      _
    $region45: #{student_forward.1} parent=1 // pred_fallthru
      _
    // Predicated region
    $region46: #{student_forward.1} parent=1 // pred_check
      _
    $region47: #{student_forward.1} parent=1 // pred_check_branch
      %49 = sbr.rel (0) target = $region49
    $region48: #{student_forward.1} parent=1 // pred_region
      _
    $region49: #{student_forward.1} parent=1 // pred_fallthru
      _
    // Predicated region
    $region50: #{student_forward.1} parent=1 // pred_check
      _
    $region51: #{student_forward.1} parent=1 // pred_check_branch
      %51 = sbr.rel (0) target = $region53
    $region52: #{student_forward.1} parent=1 // pred_region
      _
    $region53: #{student_forward.1} parent=1 // pred_fallthru
      _
    // Predicated region
    $region54: #{student_forward.1} parent=1 // pred_check
      _
    $region55: #{student_forward.1} parent=1 // pred_check_branch
      %53 = sbr.rel (0) target = $region57
    $region56: #{student_forward.1} parent=1 // pred_region
      _
    $region57: #{student_forward.1} parent=1 // pred_fallthru
      _
    // Predicated region
    $region58: #{student_forward.1} parent=1 // pred_check
      _
    $region59: #{student_forward.1} parent=1 // pred_check_branch
      %55 = sbr.rel (0) target = $region61
    $region60: #{student_forward.1} parent=1 // pred_region
      _
    $region61: #{student_forward.1} parent=1 // pred_fallthru
      _
    // Predicated region
    $region62: #{student_forward.1} parent=1 // pred_check
      _
    $region63: #{student_forward.1} parent=1 // pred_check_branch
      %57 = sbr.rel (0) target = $region65
    $region64: #{student_forward.1} parent=1 // pred_region
      _
    $region65: #{student_forward.1} parent=1 // pred_fallthru
      _
    // Predicated region
    $region66: #{student_forward.1} parent=1 // pred_check
      _
    $region67: #{student_forward.1} parent=1 // pred_check_branch
      %59 = sbr.rel (0) target = $region69
    $region68: #{student_forward.1} parent=1 // pred_region
      _
    $region69: #{student_forward.1} parent=1 // pred_fallthru
      _
    // Predicated region
    $region70: #{student_forward.1} parent=1 // pred_check
      _
    $region71: #{student_forward.1} parent=1 // pred_check_branch
      %61 = sbr.rel (0) target = $region73
    $region72: #{student_forward.1} parent=1 // pred_region
      _
    $region73: #{student_forward.1} parent=1 // pred_fallthru
      _
    // Predicated region
    $region74: #{student_forward.1} parent=1 // pred_check
      _
    $region75: #{student_forward.1} parent=1 // pred_check_branch
      %63 = sbr.rel (0) target = $region77
    $region76: #{student_forward.1} parent=1 // pred_region
      _
    $region77: #{student_forward.1} parent=1 // pred_fallthru
      _
    // Predicated region
    $region78: #{student_forward.1} parent=1 // pred_check
      _
    $region79: #{student_forward.1} parent=1 // pred_check_branch
      %65 = sbr.rel (0) target = $region81
    $region80: #{student_forward.1} parent=1 // pred_region
      _
    $region81: #{student_forward.1} parent=1 // pred_fallthru
      _
    %v67 = vld [vmem:[%s0] sm:$0xff]
    %v68 = vld [vmem:[%s0 + $0x8] sm:$0xff]
    %v69 = vlaneseq
    %v70 = vand.u32 %v69, 127
    %71 = vset.pattern.permute.xlu0 0
    %72 = vperm.xlu0 %71, %v67
    %v73 = vpop.permute.xlu0 %72
    %74 = vset.pattern.permute.xlu0 0
    %75 = vperm.xlu0 %74, %v68
    %v76 = vpop.permute.xlu0 %75
    %vm77 = vcmp.eq.s32.totalorder %v70, %v73
    %vm78 = vcmp.eq.s32.totalorder %v70, %v76
    %v79 = vsel %vm77, 1.0, 0.0
    %v80 = vsel %vm78, 1.0, 0.0
    %v81 = vpack.c.bf16 %v80, %v79
    %v82 = vld [vmem:[%s2] sm:$0xf]
    %v83 = vld [vmem:[%s2 + $0x4] sm:$0xf]
    %v84 = vld [vmem:[%s2 + $0x8] sm:$0xf]
    %v85 = vld [vmem:[%s2 + $0xc] sm:$0xf]
    %v86 = vld [vmem:[%s2 + $0x10] sm:$0xf]
    %v87 = vld [vmem:[%s2 + $0x14] sm:$0xf]
    %v88 = vld [vmem:[%s2 + $0x18] sm:$0xf]
    %v89 = vld [vmem:[%s2 + $0x1c] sm:$0xf]
    %v90 = vld [vmem:[%s2 + $0x20] sm:$0xf]
    %v91 = vld [vmem:[%s2 + $0x24] sm:$0xf]
    %v92 = vld [vmem:[%s2 + $0x28] sm:$0xf]
    %v93 = vld [vmem:[%s2 + $0x2c] sm:$0xf]
    %v94 = vld [vmem:[%s2 + $0x30] sm:$0xf]
    %v95 = vld [vmem:[%s2 + $0x34] sm:$0xf]
    %v96 = vld [vmem:[%s2 + $0x38] sm:$0xf]
    %v97 = vld [vmem:[%s2 + $0x3c] sm:$0xf]
    %v114 = vunpack.c.l.b16 %v82
    %v115 = vunpack.c.l.b16 %v83
    %v116 = vunpack.c.l.b16 %v84
    %v117 = vunpack.c.l.b16 %v85
    %v118 = vunpack.c.l.b16 %v86
    %v119 = vunpack.c.l.b16 %v87
    %v120 = vunpack.c.l.b16 %v88
    %v121 = vunpack.c.l.b16 %v89
    %v122 = vunpack.c.l.b16 %v90
    %v123 = vunpack.c.l.b16 %v91
    %v124 = vunpack.c.l.b16 %v92
    %v125 = vunpack.c.l.b16 %v93
    %v126 = vunpack.c.l.b16 %v94
    %v127 = vunpack.c.l.b16 %v95
    %v128 = vunpack.c.l.b16 %v96
    %v129 = vunpack.c.l.b16 %v97
    %v130 = vpack.c.b16 %v115, %v114
    %v131 = vpack.c.b16 %v117, %v116
    %v132 = vpack.c.b16 %v119, %v118
    %v133 = vpack.c.b16 %v121, %v120
    %v134 = vpack.c.b16 %v123, %v122
    %v135 = vpack.c.b16 %v125, %v124
    %v136 = vpack.c.b16 %v127, %v126
    %v137 = vpack.c.b16 %v129, %v128
    %146 = vmatprep.subr.bf16.mxu0 0
    %147 = vmatpush1.bf16.msra.mxu0 %v130
    %148 = vmatprep.subr.bf16.mxu0 0
    %149 = vmatpush1.bf16.msra.mxu0 %v131
    %150 = vmatprep.subr.bf16.mxu0 0
    %151 = vmatpush1.bf16.msra.mxu0 %v132
    %152 = vmatprep.subr.bf16.mxu0 0
    %153 = vmatpush1.bf16.msra.mxu0 %v133
    %154 = vmatprep.subr.bf16.mxu0 0
    %155 = vmatpush1.bf16.msra.mxu0 %v134
    %156 = vmatprep.subr.bf16.mxu0 0
    %157 = vmatpush1.bf16.msra.mxu0 %v135
    %158 = vmatprep.subr.bf16.mxu0 0
    %159 = vmatpush1.bf16.msra.mxu0 %v136
    %160 = vmatprep.subr.bf16.mxu0 0
    %161 = vmatpush1.bf16.msra.mxu0 %v137
    %162 = vmatprep.subr.bf16.mxu0 0
    %163 = vmatpush1.bf16.msra.mxu0 0
    %164 = vmatprep.subr.bf16.mxu0 0
    %165 = vmatpush1.bf16.msra.mxu0 0
    %166 = vmatprep.subr.bf16.mxu0 0
    %167 = vmatpush1.bf16.msra.mxu0 0
    %168 = vmatprep.subr.bf16.mxu0 0
    %169 = vmatpush1.bf16.msra.mxu0 0
    %170 = vmatprep.subr.bf16.mxu0 0
    %171 = vmatpush1.bf16.msra.mxu0 0
    %172 = vmatprep.subr.bf16.mxu0 0
    %173 = vmatpush1.bf16.msra.mxu0 0
    %174 = vmatprep.subr.bf16.mxu0 0
    %175 = vmatpush1.bf16.msra.mxu0 0
    %176 = vmatprep.subr.bf16.mxu0 0
    %177 = vmatpush1.bf16.msra.mxu0 0
    %178 = vmatprep.mubr.bf16.mxu0 0
    %179 = vmatmul.mubr.bf16.gmra.mrb[0].mxu0 %v81
    %v180 = vpop.f32.mrb[0].mxu0
    %v181 = vadd.f32 0.0, %v180
    %v182 = vpop.f32.mrb[0].mxu0
    %v183 = vpop.f32.mrb[0].mxu0
    %v184 = vadd.f32 0.0, %v183
    %v185 = vpop.f32.mrb[0].mxu0
    %186 = vdwg.mxu0
    %v187 = vld [vmem:[%s3] sm:$0xff]
    %v188 = vadd.f32 %v181, %v187
    %v189 = vadd.f32 %v184, %v187
    %v190 = vld [vmem:[%s4] sm:$0x1]
    %v191 = vld [vmem:[%s5] sm:$0x1]
    %vm192 = vcmask 261120
    %v193 = vsel %vm192, %v188, 0.0
    %194 = vadd.xlane.f32.xlu0 %v193
    %v195 = vpop.xlane.xlu0 %194
    %v196 = vsel %vm192, %v189, 0.0
    %197 = vadd.xlane.f32.xlu0 %v196
    %v198 = vpop.xlane.xlu0 %197
    %v199 = vrcp.pop 32.0
    %v200 = vmul.f32 %v195, %v199
    %v201 = vmul.f32 %v198, %v199
    %v202 = vsub.f32 %v188, %v200
    %v203 = vsub.f32 %v189, %v201
    %v204 = vmul.f32 %v202, %v202
    %v205 = vmul.f32 %v203, %v203
    %v206 = vsel %vm192, %v204, 0.0
    %207 = vadd.xlane.f32.xlu0 %v206
    %v208 = vpop.xlane.xlu0 %207
    %v209 = vsel %vm192, %v205, 0.0
    %210 = vadd.xlane.f32.xlu0 %v209
    %v211 = vpop.xlane.xlu0 %210
    %v212 = vmul.f32 %v208, %v199
    %v213 = vmul.f32 %v211, %v199
    %v214 = vadd.f32 %v212, 1e-12
    %v215 = vadd.f32 %v213, 1e-12
    %v216 = vrsqrt.pop %v214
    %v217 = vrsqrt.pop %v215
    %v218 = vmul.f32 %v202, %v216
    %v219 = vmul.f32 %v203, %v217
    %v221 = vlaneseq
    %v222 = vshrl.u32 %v221, 7
    %v223 = vsub.s32 0, %v222
    %v224 = vrot.slane %v190, %v223
    %v226 = vmul.f32 %v218, %v224
    %v227 = vmul.f32 %v219, %v224
    %v229 = vlaneseq
    %v230 = vshrl.u32 %v229, 7
    %v231 = vsub.s32 0, %v230
    %v232 = vrot.slane %v191, %v231
    %v234 = vadd.f32 %v226, %v232
    %v235 = vadd.f32 %v227, %v232
    %v236 = vld [vmem:[%s1] sm:$0x1]
    %v237 = vld [vmem:[%s1 + $0x1] sm:$0x1]
    %v238 = vcvt.s32.f32 %v236
    %v239 = vcvt.s32.f32 %v237
    %v240 = vsub.f32 1.0, %v238
    %v241 = vsub.f32 1.0, %v239
    %v242 = vmul.f32 %v240, -1e+09
    %v243 = vmul.f32 %v241, -1e+09
    %v244 = vpack.c.bf16 %v235, %v234
    %v245 = vld [vmem:[%s6] sm:$0xf]
    %v246 = vld [vmem:[%s6 + $0x4] sm:$0xf]
    %v247 = vld [vmem:[%s6 + $0x8] sm:$0xf]
    %v248 = vld [vmem:[%s6 + $0xc] sm:$0xf]
    %v249 = vld [vmem:[%s7] sm:$0x1]
    %v251 = vlaneseq
    %v252 = vshrl.u32 %v251, 7
    %v253 = vsub.s32 0, %v252
    %v254 = vrot.slane %v249, %v253
    %v260 = vunpack.c.l.b16 %v245
    %v261 = vunpack.c.l.b16 %v246
    %v262 = vunpack.c.l.b16 %v247
    %v263 = vunpack.c.l.b16 %v248
    %v264 = vpack.c.b16 %v261, %v260
    %v265 = vpack.c.b16 %v263, %v262
    %v269 = vsel %vm192, %v244, 0
    %271 = vmatprep.subr.bf16.mxu0 0
    %272 = vmatpush1.bf16.msra.mxu0 %v264
    %273 = vmatprep.subr.bf16.mxu0 0
    %274 = vmatpush1.bf16.msra.mxu0 %v265
    %275 = vmatprep.subr.bf16.mxu0 0
    %276 = vmatpush1.bf16.msra.mxu0 0
    %277 = vmatprep.subr.bf16.mxu0 0
    %278 = vmatpush1.bf16.msra.mxu0 0
    %279 = vmatprep.subr.bf16.mxu0 0
    %280 = vmatpush1.bf16.msra.mxu0 0
    %281 = vmatprep.subr.bf16.mxu0 0
    %282 = vmatpush1.bf16.msra.mxu0 0
    %283 = vmatprep.subr.bf16.mxu0 0
    %284 = vmatpush1.bf16.msra.mxu0 0
    %285 = vmatprep.subr.bf16.mxu0 0
    %286 = vmatpush1.bf16.msra.mxu0 0
    %287 = vmatprep.subr.bf16.mxu0 0
    %288 = vmatpush1.bf16.msra.mxu0 0
    %289 = vmatprep.subr.bf16.mxu0 0
    %290 = vmatpush1.bf16.msra.mxu0 0
    %291 = vmatprep.subr.bf16.mxu0 0
    %292 = vmatpush1.bf16.msra.mxu0 0
    %293 = vmatprep.subr.bf16.mxu0 0
    %294 = vmatpush1.bf16.msra.mxu0 0
    %295 = vmatprep.subr.bf16.mxu0 0
    %296 = vmatpush1.bf16.msra.mxu0 0
    %297 = vmatprep.subr.bf16.mxu0 0
    %298 = vmatpush1.bf16.msra.mxu0 0
    %299 = vmatprep.subr.bf16.mxu0 0
    %300 = vmatpush1.bf16.msra.mxu0 0
    %301 = vmatprep.subr.bf16.mxu0 0
    %302 = vmatpush1.bf16.msra.mxu0 0
    %303 = vmatprep.mubr.bf16.mxu0 0
    %304 = vmatmul.mubr.bf16.gmra.mrb[0].mxu0 %v269
    %v305 = vpop.f32.mrb[0].mxu0
    %v306 = vadd.f32 %v254, %v305
    %v307 = vpop.f32.mrb[0].mxu0
    %v308 = vpop.f32.mrb[0].mxu0
    %v309 = vadd.f32 %v254, %v308
    %v310 = vpop.f32.mrb[0].mxu0
    %311 = vdwg.mxu0
    %v312 = vpack.c.bf16 %v306, %v306
    %v313 = vpack.c.bf16 %v309, %v309
    %315 = vrot.lane.b32.xlu0 %v312, 96
    %v316 = vpop.permute.xlu0 %315
    %vm317 = vcmask 130048
    %v319 = vsel %vm317, %v312, 0
    %v322 = vsel %vm317, %v316, 0
    %324 = vmatprep.subr.bf16.mxu0 0
    %325 = vmatpush1.bf16.xpose.msra.mxu0 %v322
    %326 = vmatprep.subr.bf16.mxu0 0
    %327 = vmatpush1.bf16.xpose.msra.mxu0 0
    %328 = vmatprep.subr.bf16.mxu0 0
    %329 = vmatpush1.bf16.xpose.msra.mxu0 0
    %330 = vmatprep.subr.bf16.mxu0 0
    %331 = vmatpush1.bf16.xpose.msra.mxu0 0
    %332 = vmatprep.subr.bf16.mxu0 0
    %333 = vmatpush1.bf16.xpose.msra.mxu0 0
    %334 = vmatprep.subr.bf16.mxu0 0
    %335 = vmatpush1.bf16.xpose.msra.mxu0 0
    %336 = vmatprep.subr.bf16.mxu0 0
    %337 = vmatpush1.bf16.xpose.msra.mxu0 0
    %338 = vmatprep.subr.bf16.mxu0 0
    %339 = vmatpush1.bf16.xpose.msra.mxu0 0
    %340 = vmatprep.subr.bf16.mxu0 0
    %341 = vmatpush1.bf16.xpose.msra.mxu0 0
    %342 = vmatprep.subr.bf16.mxu0 0
    %343 = vmatpush1.bf16.xpose.msra.mxu0 0
    %344 = vmatprep.subr.bf16.mxu0 0
    %345 = vmatpush1.bf16.xpose.msra.mxu0 0
    %346 = vmatprep.subr.bf16.mxu0 0
    %347 = vmatpush1.bf16.xpose.msra.mxu0 0
    %348 = vmatprep.subr.bf16.mxu0 0
    %349 = vmatpush1.bf16.xpose.msra.mxu0 0
    %350 = vmatprep.subr.bf16.mxu0 0
    %351 = vmatpush1.bf16.xpose.msra.mxu0 0
    %352 = vmatprep.subr.bf16.mxu0 0
    %353 = vmatpush1.bf16.xpose.msra.mxu0 0
    %354 = vmatprep.subr.bf16.mxu0 0
    %355 = vmatpush1.bf16.xpose.msra.mxu0 0
    %356 = vmatprep.mubr.bf16.mxu0 0
    %357 = vmatmul.mubr.bf16.gmra.mrb[0].mxu0 %v319
    %v358 = vpop.f32.mrb[0].mxu0
    %v359 = vadd.f32 0.0, %v358
    %v360 = vpop.f32.mrb[0].mxu0
    %v361 = vpop.f32.mrb[0].mxu0
    %v362 = vpop.f32.mrb[0].mxu0
    %363 = vdwg.mxu0
    %365 = vrot.lane.b32.xlu0 %v313, 96
    %v366 = vpop.permute.xlu0 %365
    %v368 = vsel %vm317, %v313, 0
    %v371 = vsel %vm317, %v366, 0
    %373 = vmatprep.subr.bf16.mxu0 0
    %374 = vmatpush1.bf16.xpose.msra.mxu0 %v371
    %375 = vmatprep.subr.bf16.mxu0 0
    %376 = vmatpush1.bf16.xpose.msra.mxu0 0
    %377 = vmatprep.subr.bf16.mxu0 0
    %378 = vmatpush1.bf16.xpose.msra.mxu0 0
    %379 = vmatprep.subr.bf16.mxu0 0
    %380 = vmatpush1.bf16.xpose.msra.mxu0 0
    %381 = vmatprep.subr.bf16.mxu0 0
    %382 = vmatpush1.bf16.xpose.msra.mxu0 0
    %383 = vmatprep.subr.bf16.mxu0 0
    %384 = vmatpush1.bf16.xpose.msra.mxu0 0
    %385 = vmatprep.subr.bf16.mxu0 0
    %386 = vmatpush1.bf16.xpose.msra.mxu0 0
    %387 = vmatprep.subr.bf16.mxu0 0
    %388 = vmatpush1.bf16.xpose.msra.mxu0 0
    %389 = vmatprep.subr.bf16.mxu0 0
    %390 = vmatpush1.bf16.xpose.msra.mxu0 0
    %391 = vmatprep.subr.bf16.mxu0 0
    %392 = vmatpush1.bf16.xpose.msra.mxu0 0
    %393 = vmatprep.subr.bf16.mxu0 0
    %394 = vmatpush1.bf16.xpose.msra.mxu0 0
    %395 = vmatprep.subr.bf16.mxu0 0
    %396 = vmatpush1.bf16.xpose.msra.mxu0 0
    %397 = vmatprep.subr.bf16.mxu0 0
    %398 = vmatpush1.bf16.xpose.msra.mxu0 0
    %399 = vmatprep.subr.bf16.mxu0 0
    %400 = vmatpush1.bf16.xpose.msra.mxu0 0
    %401 = vmatprep.subr.bf16.mxu0 0
    %402 = vmatpush1.bf16.xpose.msra.mxu0 0
    %403 = vmatprep.subr.bf16.mxu0 0
    %404 = vmatpush1.bf16.xpose.msra.mxu0 0
    %405 = vmatprep.mubr.bf16.mxu0 0
    %406 = vmatmul.mubr.bf16.gmra.mrb[0].mxu0 %v368
    %v407 = vpop.f32.mrb[0].mxu0
    %v408 = vadd.f32 0.0, %v407
    %v409 = vpop.f32.mrb[0].mxu0
    %v410 = vpop.f32.mrb[0].mxu0
    %v411 = vpop.f32.mrb[0].mxu0
    %412 = vdwg.mxu0
    %v413 = vmul.f32 %v359, 0.25
    %v414 = vmul.f32 %v408, 0.25
    %v417 = vlaneseq
    %v418 = vshrl.u32 %v417, 7
    %v419 = vsub.s32 0, %v418
    %v420 = vrot.slane %v242, %v419
    %v421 = vlaneseq
    %v422 = vshrl.u32 %v421, 7
    %v423 = vsub.s32 0, %v422
    %v424 = vrot.slane %v243, %v423
    %v427 = vadd.f32 %v413, %v420
    %v428 = vadd.f32 %v414, %v424
    %vm429 = vcmask 64512
    %v430 = vsel %vm429, %v427, -inf
    %431 = vmax.xlane.f32.xlu0 %v430
    %v432 = vpop.xlane.xlu0 %431
    %v433 = vsel %vm429, %v428, -inf
    %434 = vmax.xlane.f32.xlu0 %v433
    %v435 = vpop.xlane.xlu0 %434
    %v436 = vsub.f32 %v427, %v432
    %v437 = vsub.f32 %v428, %v435
    %v438 = vmul.f32 %v436, 1.442695
    %v439 = vpow.pop %v438
    %v440 = vmul.f32 %v437, 1.442695
    %v441 = vpow.pop %v440
    %v442 = vsel %vm429, %v439, 0.0
    %443 = vadd.xlane.f32.xlu0 %v442
    %v444 = vpop.xlane.xlu0 %443
    %v445 = vsel %vm429, %v441, 0.0
    %446 = vadd.xlane.f32.xlu0 %v445
    %v447 = vpop.xlane.xlu0 %446
    %v448 = vrcp.pop %v444
    %v449 = vrcp.pop %v447
    %v450 = vmul.f32 %v439, %v448
    %v451 = vmul.f32 %v441, %v449
    %v452 = vpack.c.bf16 %v450, %v450
    %v453 = vpack.c.bf16 %v451, %v451
    %454 = vrot.lane.b32.xlu0 %v312, 64
    %v455 = vpop.permute.xlu0 %454
    %v457 = vsel %vm429, %v452, 0
    %vm459 = vcmask 1043456
    %v461 = vsel %vm459, %v455, 0
    %463 = vmatprep.subr.bf16.mxu0 0
    %464 = vmatpush1.bf16.msra.mxu0 %v461
    %465 = vmatprep.subr.bf16.mxu0 0
    %466 = vmatpush1.bf16.msra.mxu0 0
    %467 = vmatprep.subr.bf16.mxu0 0
    %468 = vmatpush1.bf16.msra.mxu0 0
    %469 = vmatprep.subr.bf16.mxu0 0
    %470 = vmatpush1.bf16.msra.mxu0 0
    %471 = vmatprep.subr.bf16.mxu0 0
    %472 = vmatpush1.bf16.msra.mxu0 0
    %473 = vmatprep.subr.bf16.mxu0 0
    %474 = vmatpush1.bf16.msra.mxu0 0
    %475 = vmatprep.subr.bf16.mxu0 0
    %476 = vmatpush1.bf16.msra.mxu0 0
    %477 = vmatprep.subr.bf16.mxu0 0
    %478 = vmatpush1.bf16.msra.mxu0 0
    %479 = vmatprep.subr.bf16.mxu0 0
    %480 = vmatpush1.bf16.msra.mxu0 0
    %481 = vmatprep.subr.bf16.mxu0 0
    %482 = vmatpush1.bf16.msra.mxu0 0
    %483 = vmatprep.subr.bf16.mxu0 0
    %484 = vmatpush1.bf16.msra.mxu0 0
    %485 = vmatprep.subr.bf16.mxu0 0
    %486 = vmatpush1.bf16.msra.mxu0 0
    %487 = vmatprep.subr.bf16.mxu0 0
    %488 = vmatpush1.bf16.msra.mxu0 0
    %489 = vmatprep.subr.bf16.mxu0 0
    %490 = vmatpush1.bf16.msra.mxu0 0
    %491 = vmatprep.subr.bf16.mxu0 0
    %492 = vmatpush1.bf16.msra.mxu0 0
    %493 = vmatprep.subr.bf16.mxu0 0
    %494 = vmatpush1.bf16.msra.mxu0 0
    %495 = vmatprep.mubr.bf16.mxu0 0
    %496 = vmatmul.mubr.bf16.gmra.mrb[0].mxu0 %v457
    %v497 = vpop.f32.mrb[0].mxu0
    %v498 = vadd.f32 0.0, %v497
    %v499 = vpop.f32.mrb[0].mxu0
    %v500 = vpop.f32.mrb[0].mxu0
    %v501 = vpop.f32.mrb[0].mxu0
    %502 = vdwg.mxu0
    %503 = vrot.lane.b32.xlu0 %v313, 64
    %v504 = vpop.permute.xlu0 %503
    %v506 = vsel %vm429, %v453, 0
    %v509 = vsel %vm459, %v504, 0
    %511 = vmatprep.subr.bf16.mxu0 0
    %512 = vmatpush1.bf16.msra.mxu0 %v509
    %513 = vmatprep.subr.bf16.mxu0 0
    %514 = vmatpush1.bf16.msra.mxu0 0
    %515 = vmatprep.subr.bf16.mxu0 0
    %516 = vmatpush1.bf16.msra.mxu0 0
    %517 = vmatprep.subr.bf16.mxu0 0
    %518 = vmatpush1.bf16.msra.mxu0 0
    %519 = vmatprep.subr.bf16.mxu0 0
    %520 = vmatpush1.bf16.msra.mxu0 0
    %521 = vmatprep.subr.bf16.mxu0 0
    %522 = vmatpush1.bf16.msra.mxu0 0
    %523 = vmatprep.subr.bf16.mxu0 0
    %524 = vmatpush1.bf16.msra.mxu0 0
    %525 = vmatprep.subr.bf16.mxu0 0
    %526 = vmatpush1.bf16.msra.mxu0 0
    %527 = vmatprep.subr.bf16.mxu0 0
    %528 = vmatpush1.bf16.msra.mxu0 0
    %529 = vmatprep.subr.bf16.mxu0 0
    %530 = vmatpush1.bf16.msra.mxu0 0
    %531 = vmatprep.subr.bf16.mxu0 0
    %532 = vmatpush1.bf16.msra.mxu0 0
    %533 = vmatprep.subr.bf16.mxu0 0
    %534 = vmatpush1.bf16.msra.mxu0 0
    %535 = vmatprep.subr.bf16.mxu0 0
    %536 = vmatpush1.bf16.msra.mxu0 0
    %537 = vmatprep.subr.bf16.mxu0 0
    %538 = vmatpush1.bf16.msra.mxu0 0
    %539 = vmatprep.subr.bf16.mxu0 0
    %540 = vmatpush1.bf16.msra.mxu0 0
    %541 = vmatprep.subr.bf16.mxu0 0
    %542 = vmatpush1.bf16.msra.mxu0 0
    %543 = vmatprep.mubr.bf16.mxu0 0
    %544 = vmatmul.mubr.bf16.gmra.mrb[0].mxu0 %v506
    %v545 = vpop.f32.mrb[0].mxu0
    %v546 = vadd.f32 0.0, %v545
    %v547 = vpop.f32.mrb[0].mxu0
    %v548 = vpop.f32.mrb[0].mxu0
    %v549 = vpop.f32.mrb[0].mxu0
    %550 = vdwg.mxu0
    %551 = vrot.lane.b32.xlu0 %v312, 112
    %v552 = vpop.permute.xlu0 %551
    %553 = vrot.lane.b32.xlu0 %v312, 80
    %v554 = vpop.permute.xlu0 %553
    %v556 = vsel %vm317, %v552, 0
    %v559 = vsel %vm317, %v554, 0
    %561 = vmatprep.subr.bf16.mxu0 0
    %562 = vmatpush1.bf16.xpose.msra.mxu0 %v559
    %563 = vmatprep.subr.bf16.mxu0 0
    %564 = vmatpush1.bf16.xpose.msra.mxu0 0
    %565 = vmatprep.subr.bf16.mxu0 0
    %566 = vmatpush1.bf16.xpose.msra.mxu0 0
    %567 = vmatprep.subr.bf16.mxu0 0
    %568 = vmatpush1.bf16.xpose.msra.mxu0 0
    %569 = vmatprep.subr.bf16.mxu0 0
    %570 = vmatpush1.bf16.xpose.msra.mxu0 0
    %571 = vmatprep.subr.bf16.mxu0 0
    %572 = vmatpush1.bf16.xpose.msra.mxu0 0
    %573 = vmatprep.subr.bf16.mxu0 0
    %574 = vmatpush1.bf16.xpose.msra.mxu0 0
    %575 = vmatprep.subr.bf16.mxu0 0
    %576 = vmatpush1.bf16.xpose.msra.mxu0 0
    %577 = vmatprep.subr.bf16.mxu0 0
    %578 = vmatpush1.bf16.xpose.msra.mxu0 0
    %579 = vmatprep.subr.bf16.mxu0 0
    %580 = vmatpush1.bf16.xpose.msra.mxu0 0
    %581 = vmatprep.subr.bf16.mxu0 0
    %582 = vmatpush1.bf16.xpose.msra.mxu0 0
    %583 = vmatprep.subr.bf16.mxu0 0
    %584 = vmatpush1.bf16.xpose.msra.mxu0 0
    %585 = vmatprep.subr.bf16.mxu0 0
    %586 = vmatpush1.bf16.xpose.msra.mxu0 0
    %587 = vmatprep.subr.bf16.mxu0 0
    %588 = vmatpush1.bf16.xpose.msra.mxu0 0
    %589 = vmatprep.subr.bf16.mxu0 0
    %590 = vmatpush1.bf16.xpose.msra.mxu0 0
    %591 = vmatprep.subr.bf16.mxu0 0
    %592 = vmatpush1.bf16.xpose.msra.mxu0 0
    %593 = vmatprep.mubr.bf16.mxu0 0
    %594 = vmatmul.mubr.bf16.gmra.mrb[0].mxu0 %v556
    %v595 = vpop.f32.mrb[0].mxu0
    %v596 = vadd.f32 0.0, %v595
    %v597 = vpop.f32.mrb[0].mxu0
    %v598 = vpop.f32.mrb[0].mxu0
    %v599 = vpop.f32.mrb[0].mxu0
    %600 = vdwg.mxu0
    %601 = vrot.lane.b32.xlu0 %v313, 112
    %v602 = vpop.permute.xlu0 %601
    %603 = vrot.lane.b32.xlu0 %v313, 80
    %v604 = vpop.permute.xlu0 %603
    %v606 = vsel %vm317, %v602, 0
    %v609 = vsel %vm317, %v604, 0
    %611 = vmatprep.subr.bf16.mxu0 0
    %612 = vmatpush1.bf16.xpose.msra.mxu0 %v609
    %613 = vmatprep.subr.bf16.mxu0 0
    %614 = vmatpush1.bf16.xpose.msra.mxu0 0
    %615 = vmatprep.subr.bf16.mxu0 0
    %616 = vmatpush1.bf16.xpose.msra.mxu0 0
    %617 = vmatprep.subr.bf16.mxu0 0
    %618 = vmatpush1.bf16.xpose.msra.mxu0 0
    %619 = vmatprep.subr.bf16.mxu0 0
    %620 = vmatpush1.bf16.xpose.msra.mxu0 0
    %621 = vmatprep.subr.bf16.mxu0 0
    %622 = vmatpush1.bf16.xpose.msra.mxu0 0
    %623 = vmatprep.subr.bf16.mxu0 0
    %624 = vmatpush1.bf16.xpose.msra.mxu0 0
    %625 = vmatprep.subr.bf16.mxu0 0
    %626 = vmatpush1.bf16.xpose.msra.mxu0 0
    %627 = vmatprep.subr.bf16.mxu0 0
    %628 = vmatpush1.bf16.xpose.msra.mxu0 0
    %629 = vmatprep.subr.bf16.mxu0 0
    %630 = vmatpush1.bf16.xpose.msra.mxu0 0
    %631 = vmatprep.subr.bf16.mxu0 0
    %632 = vmatpush1.bf16.xpose.msra.mxu0 0
    %633 = vmatprep.subr.bf16.mxu0 0
    %634 = vmatpush1.bf16.xpose.msra.mxu0 0
    %635 = vmatprep.subr.bf16.mxu0 0
    %636 = vmatpush1.bf16.xpose.msra.mxu0 0
    %637 = vmatprep.subr.bf16.mxu0 0
    %638 = vmatpush1.bf16.xpose.msra.mxu0 0
    %639 = vmatprep.subr.bf16.mxu0 0
    %640 = vmatpush1.bf16.xpose.msra.mxu0 0
    %641 = vmatprep.subr.bf16.mxu0 0
    %642 = vmatpush1.bf16.xpose.msra.mxu0 0
    %643 = vmatprep.mubr.bf16.mxu0 0
    %644 = vmatmul.mubr.bf16.gmra.mrb[0].mxu0 %v606
    %v645 = vpop.f32.mrb[0].mxu0
    %v646 = vadd.f32 0.0, %v645
    %v647 = vpop.f32.mrb[0].mxu0
    %v648 = vpop.f32.mrb[0].mxu0
    %v649 = vpop.f32.mrb[0].mxu0
    %650 = vdwg.mxu0
    %v651 = vmul.f32 %v596, 0.25
    %v652 = vmul.f32 %v646, 0.25
    %v653 = vadd.f32 %v651, %v420
    %v654 = vadd.f32 %v652, %v424
    %v655 = vsel %vm429, %v653, -inf
    %656 = vmax.xlane.f32.xlu0 %v655
    %v657 = vpop.xlane.xlu0 %656
    %v658 = vsel %vm429, %v654, -inf
    %659 = vmax.xlane.f32.xlu0 %v658
    %v660 = vpop.xlane.xlu0 %659
    %v661 = vsub.f32 %v653, %v657
    %v662 = vsub.f32 %v654, %v660
    %v663 = vmul.f32 %v661, 1.442695
    %v664 = vpow.pop %v663
    %v665 = vmul.f32 %v662, 1.442695
    %v666 = vpow.pop %v665
    %v667 = vsel %vm429, %v664, 0.0
    %668 = vadd.xlane.f32.xlu0 %v667
    %v669 = vpop.xlane.xlu0 %668
    %v670 = vsel %vm429, %v666, 0.0
    %671 = vadd.xlane.f32.xlu0 %v670
    %v672 = vpop.xlane.xlu0 %671
    %v673 = vrcp.pop %v669
    %v674 = vrcp.pop %v672
    %v675 = vmul.f32 %v664, %v673
    %v676 = vmul.f32 %v666, %v674
    %v677 = vpack.c.bf16 %v675, %v675
    %v678 = vpack.c.bf16 %v676, %v676
    %679 = vrot.lane.b32.xlu0 %v312, 48
    %v680 = vpop.permute.xlu0 %679
    %v682 = vsel %vm429, %v677, 0
    %v685 = vsel %vm459, %v680, 0
    %687 = vmatprep.subr.bf16.mxu0 0
    %688 = vmatpush1.bf16.msra.mxu0 %v685
    %689 = vmatprep.subr.bf16.mxu0 0
    %690 = vmatpush1.bf16.msra.mxu0 0
    %691 = vmatprep.subr.bf16.mxu0 0
    %692 = vmatpush1.bf16.msra.mxu0 0
    %693 = vmatprep.subr.bf16.mxu0 0
    %694 = vmatpush1.bf16.msra.mxu0 0
    %695 = vmatprep.subr.bf16.mxu0 0
    %696 = vmatpush1.bf16.msra.mxu0 0
    %697 = vmatprep.subr.bf16.mxu0 0
    %698 = vmatpush1.bf16.msra.mxu0 0
    %699 = vmatprep.subr.bf16.mxu0 0
    %700 = vmatpush1.bf16.msra.mxu0 0
    %701 = vmatprep.subr.bf16.mxu0 0
    %702 = vmatpush1.bf16.msra.mxu0 0
    %703 = vmatprep.subr.bf16.mxu0 0
    %704 = vmatpush1.bf16.msra.mxu0 0
    %705 = vmatprep.subr.bf16.mxu0 0
    %706 = vmatpush1.bf16.msra.mxu0 0
    %707 = vmatprep.subr.bf16.mxu0 0
    %708 = vmatpush1.bf16.msra.mxu0 0
    %709 = vmatprep.subr.bf16.mxu0 0
    %710 = vmatpush1.bf16.msra.mxu0 0
    %711 = vmatprep.subr.bf16.mxu0 0
    %712 = vmatpush1.bf16.msra.mxu0 0
    %713 = vmatprep.subr.bf16.mxu0 0
    %714 = vmatpush1.bf16.msra.mxu0 0
    %715 = vmatprep.subr.bf16.mxu0 0
    %716 = vmatpush1.bf16.msra.mxu0 0
    %717 = vmatprep.subr.bf16.mxu0 0
    %718 = vmatpush1.bf16.msra.mxu0 0
    %719 = vmatprep.mubr.bf16.mxu0 0
    %720 = vmatmul.mubr.bf16.gmra.mrb[0].mxu0 %v682
    %v721 = vpop.f32.mrb[0].mxu0
    %v722 = vadd.f32 0.0, %v721
    %v723 = vpop.f32.mrb[0].mxu0
    %v724 = vpop.f32.mrb[0].mxu0
    %v725 = vpop.f32.mrb[0].mxu0
    %726 = vdwg.mxu0
    %727 = vrot.lane.b32.xlu0 %v313, 48
    %v728 = vpop.permute.xlu0 %727
    %v730 = vsel %vm429, %v678, 0
    %v733 = vsel %vm459, %v728, 0
    %735 = vmatprep.subr.bf16.mxu0 0
    %736 = vmatpush1.bf16.msra.mxu0 %v733
    %737 = vmatprep.subr.bf16.mxu0 0
    %738 = vmatpush1.bf16.msra.mxu0 0
    %739 = vmatprep.subr.bf16.mxu0 0
    %740 = vmatpush1.bf16.msra.mxu0 0
    %741 = vmatprep.subr.bf16.mxu0 0
    %742 = vmatpush1.bf16.msra.mxu0 0
    %743 = vmatprep.subr.bf16.mxu0 0
    %744 = vmatpush1.bf16.msra.mxu0 0
    %745 = vmatprep.subr.bf16.mxu0 0
    %746 = vmatpush1.bf16.msra.mxu0 0
    %747 = vmatprep.subr.bf16.mxu0 0
    %748 = vmatpush1.bf16.msra.mxu0 0
    %749 = vmatprep.subr.bf16.mxu0 0
    %750 = vmatpush1.bf16.msra.mxu0 0
    %751 = vmatprep.subr.bf16.mxu0 0
    %752 = vmatpush1.bf16.msra.mxu0 0
    %753 = vmatprep.subr.bf16.mxu0 0
    %754 = vmatpush1.bf16.msra.mxu0 0
    %755 = vmatprep.subr.bf16.mxu0 0
    %756 = vmatpush1.bf16.msra.mxu0 0
    %757 = vmatprep.subr.bf16.mxu0 0
    %758 = vmatpush1.bf16.msra.mxu0 0
    %759 = vmatprep.subr.bf16.mxu0 0
    %760 = vmatpush1.bf16.msra.mxu0 0
    %761 = vmatprep.subr.bf16.mxu0 0
    %762 = vmatpush1.bf16.msra.mxu0 0
    %763 = vmatprep.subr.bf16.mxu0 0
    %764 = vmatpush1.bf16.msra.mxu0 0
    %765 = vmatprep.subr.bf16.mxu0 0
    %766 = vmatpush1.bf16.msra.mxu0 0
    %767 = vmatprep.mubr.bf16.mxu0 0
    %768 = vmatmul.mubr.bf16.gmra.mrb[0].mxu0 %v730
    %v769 = vpop.f32.mrb[0].mxu0
    %v770 = vadd.f32 0.0, %v769
    %v771 = vpop.f32.mrb[0].mxu0
    %v772 = vpop.f32.mrb[0].mxu0
    %v773 = vpop.f32.mrb[0].mxu0
    %774 = vdwg.mxu0
    %777 = vrot.lane.b32.xlu0 %v722, 16
    %v778 = vpop.permute.xlu0 %777
    %779 = vrot.lane.b32.xlu0 %v770, 16
    %v780 = vpop.permute.xlu0 %779
    %v783 = vsel %vm317, %v498, %v778
    %v784 = vsel %vm317, %v546, %v780
    %v785 = vpack.c.bf16 %v784, %v783
    %v786 = vld [vmem:[%s8] sm:$0xf]
    %v787 = vld [vmem:[%s8 + $0x4] sm:$0xf]
    %v788 = vld [vmem:[%s8 + $0x8] sm:$0xf]
    %v789 = vld [vmem:[%s8 + $0xc] sm:$0xf]
    %v790 = vld [vmem:[%s9] sm:$0x1]
    %v792 = vlaneseq
    %v793 = vshrl.u32 %v792, 7
    %v794 = vsub.s32 0, %v793
    %v795 = vrot.slane %v790, %v794
    %v801 = vunpack.c.l.b16 %v786
    %v802 = vunpack.c.l.b16 %v787
    %v803 = vunpack.c.l.b16 %v788
    %v804 = vunpack.c.l.b16 %v789
    %v805 = vpack.c.b16 %v802, %v801
    %v806 = vpack.c.b16 %v804, %v803
    %v810 = vsel %vm192, %v785, 0
    %812 = vmatprep.subr.bf16.mxu0 0
    %813 = vmatpush1.bf16.msra.mxu0 %v805
    %814 = vmatprep.subr.bf16.mxu0 0
    %815 = vmatpush1.bf16.msra.mxu0 %v806
    %816 = vmatprep.subr.bf16.mxu0 0
    %817 = vmatpush1.bf16.msra.mxu0 0
    %818 = vmatprep.subr.bf16.mxu0 0
    %819 = vmatpush1.bf16.msra.mxu0 0
    %820 = vmatprep.subr.bf16.mxu0 0
    %821 = vmatpush1.bf16.msra.mxu0 0
    %822 = vmatprep.subr.bf16.mxu0 0
    %823 = vmatpush1.bf16.msra.mxu0 0
    %824 = vmatprep.subr.bf16.mxu0 0
    %825 = vmatpush1.bf16.msra.mxu0 0
    %826 = vmatprep.subr.bf16.mxu0 0
    %827 = vmatpush1.bf16.msra.mxu0 0
    %828 = vmatprep.subr.bf16.mxu0 0
    %829 = vmatpush1.bf16.msra.mxu0 0
    %830 = vmatprep.subr.bf16.mxu0 0
    %831 = vmatpush1.bf16.msra.mxu0 0
    %832 = vmatprep.subr.bf16.mxu0 0
    %833 = vmatpush1.bf16.msra.mxu0 0
    %834 = vmatprep.subr.bf16.mxu0 0
    %835 = vmatpush1.bf16.msra.mxu0 0
    %836 = vmatprep.subr.bf16.mxu0 0
    %837 = vmatpush1.bf16.msra.mxu0 0
    %838 = vmatprep.subr.bf16.mxu0 0
    %839 = vmatpush1.bf16.msra.mxu0 0
    %840 = vmatprep.subr.bf16.mxu0 0
    %841 = vmatpush1.bf16.msra.mxu0 0
    %842 = vmatprep.subr.bf16.mxu0 0
    %843 = vmatpush1.bf16.msra.mxu0 0
    %844 = vmatprep.mubr.bf16.mxu0 0
    %845 = vmatmul.mubr.bf16.gmra.mrb[0].mxu0 %v810
    %v846 = vpop.f32.mrb[0].mxu0
    %v847 = vadd.f32 %v795, %v846
    %v848 = vpop.f32.mrb[0].mxu0
    %v849 = vpop.f32.mrb[0].mxu0
    %v850 = vadd.f32 %v795, %v849
    %v851 = vpop.f32.mrb[0].mxu0
    %852 = vdwg.mxu0
    %v853 = vadd.f32 %v234, %v847
    %v854 = vadd.f32 %v235, %v850
    %v855 = vld [vmem:[%s10] sm:$0x1]
    %v856 = vld [vmem:[%s11] sm:$0x1]
    %v857 = vsel %vm192, %v853, 0.0
    %858 = vadd.xlane.f32.xlu0 %v857
    %v859 = vpop.xlane.xlu0 %858
    %v860 = vsel %vm192, %v854, 0.0
    %861 = vadd.xlane.f32.xlu0 %v860
    %v862 = vpop.xlane.xlu0 %861
    %v863 = vmul.f32 %v859, %v199
    %v864 = vmul.f32 %v862, %v199
    %v865 = vsub.f32 %v853, %v863
    %v866 = vsub.f32 %v854, %v864
    %v867 = vmul.f32 %v865, %v865
    %v868 = vmul.f32 %v866, %v866
    %v869 = vsel %vm192, %v867, 0.0
    %870 = vadd.xlane.f32.xlu0 %v869
    %v871 = vpop.xlane.xlu0 %870
    %v872 = vsel %vm192, %v868, 0.0
    %873 = vadd.xlane.f32.xlu0 %v872
    %v874 = vpop.xlane.xlu0 %873
    %v875 = vmul.f32 %v871, %v199
    %v876 = vmul.f32 %v874, %v199
    %v877 = vadd.f32 %v875, 1e-12
    %v878 = vadd.f32 %v876, 1e-12
    %v879 = vrsqrt.pop %v877
    %v880 = vrsqrt.pop %v878
    %v881 = vmul.f32 %v865, %v879
    %v882 = vmul.f32 %v866, %v880
    %v884 = vlaneseq
    %v885 = vshrl.u32 %v884, 7
    %v886 = vsub.s32 0, %v885
    %v887 = vrot.slane %v855, %v886
    %v889 = vmul.f32 %v881, %v887
    %v890 = vmul.f32 %v882, %v887
    %v892 = vlaneseq
    %v893 = vshrl.u32 %v892, 7
    %v894 = vsub.s32 0, %v893
    %v895 = vrot.slane %v856, %v894
    %v897 = vadd.f32 %v889, %v895
    %v898 = vadd.f32 %v890, %v895
    %v899 = vpack.c.bf16 %v898, %v897
    %v900 = vld [vmem:[%s12] sm:$0xf]
    %v901 = vld [vmem:[%s12 + $0x4] sm:$0xf]
    %v902 = vld [vmem:[%s12 + $0x8] sm:$0xf]
    %v903 = vld [vmem:[%s12 + $0xc] sm:$0xf]
    %v904 = vld [vmem:[%s13] sm:$0x1]
    %v906 = vlaneseq
    %v907 = vshrl.u32 %v906, 7
    %v908 = vsub.s32 0, %v907
    %v909 = vrot.slane %v904, %v908
    %v915 = vunpack.c.l.b16 %v900
    %v916 = vunpack.c.l.b16 %v901
    %v917 = vunpack.c.l.b16 %v902
    %v918 = vunpack.c.l.b16 %v903
    %v919 = vpack.c.b16 %v916, %v915
    %v920 = vpack.c.b16 %v918, %v917
    %v924 = vsel %vm192, %v899, 0
    %926 = vmatprep.subr.bf16.mxu0 0
    %927 = vmatpush1.bf16.msra.mxu0 %v919
    %928 = vmatprep.subr.bf16.mxu0 0
    %929 = vmatpush1.bf16.msra.mxu0 %v920
    %930 = vmatprep.subr.bf16.mxu0 0
    %931 = vmatpush1.bf16.msra.mxu0 0
    %932 = vmatprep.subr.bf16.mxu0 0
    %933 = vmatpush1.bf16.msra.mxu0 0
    %934 = vmatprep.subr.bf16.mxu0 0
    %935 = vmatpush1.bf16.msra.mxu0 0
    %936 = vmatprep.subr.bf16.mxu0 0
    %937 = vmatpush1.bf16.msra.mxu0 0
    %938 = vmatprep.subr.bf16.mxu0 0
    %939 = vmatpush1.bf16.msra.mxu0 0
    %940 = vmatprep.subr.bf16.mxu0 0
    %941 = vmatpush1.bf16.msra.mxu0 0
    %942 = vmatprep.subr.bf16.mxu0 0
    %943 = vmatpush1.bf16.msra.mxu0 0
    %944 = vmatprep.subr.bf16.mxu0 0
    %945 = vmatpush1.bf16.msra.mxu0 0
    %946 = vmatprep.subr.bf16.mxu0 0
    %947 = vmatpush1.bf16.msra.mxu0 0
    %948 = vmatprep.subr.bf16.mxu0 0
    %949 = vmatpush1.bf16.msra.mxu0 0
    %950 = vmatprep.subr.bf16.mxu0 0
    %951 = vmatpush1.bf16.msra.mxu0 0
    %952 = vmatprep.subr.bf16.mxu0 0
    %953 = vmatpush1.bf16.msra.mxu0 0
    %954 = vmatprep.subr.bf16.mxu0 0
    %955 = vmatpush1.bf16.msra.mxu0 0
    %956 = vmatprep.subr.bf16.mxu0 0
    %957 = vmatpush1.bf16.msra.mxu0 0
    %958 = vmatprep.mubr.bf16.mxu0 0
    %959 = vmatmul.mubr.bf16.gmra.mrb[0].mxu0 %v924
    %v960 = vpop.f32.mrb[0].mxu0
    %v961 = vadd.f32 %v909, %v960
    %v962 = vpop.f32.mrb[0].mxu0
    %v963 = vpop.f32.mrb[0].mxu0
    %v964 = vadd.f32 %v909, %v963
    %v965 = vpop.f32.mrb[0].mxu0
    %966 = vdwg.mxu0
    %v967 = vmul.f32 %v961, %v961
    %v968 = vmul.f32 %v964, %v964
    %v969 = vmul.f32 %v961, %v967
    %v970 = vmul.f32 %v964, %v968
    %v971 = vmul.f32 %v969, 0.044715
    %v972 = vmul.f32 %v970, 0.044715
    %v973 = vadd.f32 %v961, %v971
    %v974 = vadd.f32 %v964, %v972
    %v975 = vmul.f32 %v973, 0.7978846
    %v976 = vmul.f32 %v974, 0.7978846
    %v977 = vtanh.pop %v975
    %v978 = vtanh.pop %v976
    %v979 = vadd.f32 %v977, 1.0
    %v980 = vadd.f32 %v978, 1.0
    %v981 = vmul.f32 %v979, 0.5
    %v982 = vmul.f32 %v980, 0.5
    %v983 = vmul.f32 %v961, %v981
    %v984 = vmul.f32 %v964, %v982
    %v985 = vpack.c.bf16 %v984, %v983
    %v986 = vld [vmem:[%s14] sm:$0xf]
    %v987 = vld [vmem:[%s14 + $0x4] sm:$0xf]
    %v988 = vld [vmem:[%s14 + $0x8] sm:$0xf]
    %v989 = vld [vmem:[%s14 + $0xc] sm:$0xf]
    %v990 = vld [vmem:[%s14 + $0x10] sm:$0xf]
    %v991 = vld [vmem:[%s14 + $0x14] sm:$0xf]
    %v992 = vld [vmem:[%s14 + $0x18] sm:$0xf]
    %v993 = vld [vmem:[%s14 + $0x1c] sm:$0xf]
    %v994 = vld [vmem:[%s15] sm:$0x1]
    %v996 = vlaneseq
    %v997 = vshrl.u32 %v996, 7
    %v998 = vsub.s32 0, %v997
    %v999 = vrot.slane %v994, %v998
    %v1009 = vunpack.c.l.b16 %v986
    %v1010 = vunpack.c.l.b16 %v987
    %v1011 = vunpack.c.l.b16 %v988
    %v1012 = vunpack.c.l.b16 %v989
    %v1013 = vunpack.c.l.b16 %v990
    %v1014 = vunpack.c.l.b16 %v991
    %v1015 = vunpack.c.l.b16 %v992
    %v1016 = vunpack.c.l.b16 %v993
    %v1017 = vpack.c.b16 %v1010, %v1009
    %v1018 = vpack.c.b16 %v1012, %v1011
    %v1019 = vpack.c.b16 %v1014, %v1013
    %v1020 = vpack.c.b16 %v1016, %v1015
    %vm1025 = vcmask 523264
    %v1027 = vsel %vm1025, %v985, 0
    %1029 = vmatprep.subr.bf16.mxu0 0
    %1030 = vmatpush1.bf16.msra.mxu0 %v1017
    %1031 = vmatprep.subr.bf16.mxu0 0
    %1032 = vmatpush1.bf16.msra.mxu0 %v1018
    %1033 = vmatprep.subr.bf16.mxu0 0
    %1034 = vmatpush1.bf16.msra.mxu0 %v1019
    %1035 = vmatprep.subr.bf16.mxu0 0
    %1036 = vmatpush1.bf16.msra.mxu0 %v1020
    %1037 = vmatprep.subr.bf16.mxu0 0
    %1038 = vmatpush1.bf16.msra.mxu0 0
    %1039 = vmatprep.subr.bf16.mxu0 0
    %1040 = vmatpush1.bf16.msra.mxu0 0
    %1041 = vmatprep.subr.bf16.mxu0 0
    %1042 = vmatpush1.bf16.msra.mxu0 0
    %1043 = vmatprep.subr.bf16.mxu0 0
    %1044 = vmatpush1.bf16.msra.mxu0 0
    %1045 = vmatprep.subr.bf16.mxu0 0
    %1046 = vmatpush1.bf16.msra.mxu0 0
    %1047 = vmatprep.subr.bf16.mxu0 0
    %1048 = vmatpush1.bf16.msra.mxu0 0
    %1049 = vmatprep.subr.bf16.mxu0 0
    %1050 = vmatpush1.bf16.msra.mxu0 0
    %1051 = vmatprep.subr.bf16.mxu0 0
    %1052 = vmatpush1.bf16.msra.mxu0 0
    %1053 = vmatprep.subr.bf16.mxu0 0
    %1054 = vmatpush1.bf16.msra.mxu0 0
    %1055 = vmatprep.subr.bf16.mxu0 0
    %1056 = vmatpush1.bf16.msra.mxu0 0
    %1057 = vmatprep.subr.bf16.mxu0 0
    %1058 = vmatpush1.bf16.msra.mxu0 0
    %1059 = vmatprep.subr.bf16.mxu0 0
    %1060 = vmatpush1.bf16.msra.mxu0 0
    %1061 = vmatprep.mubr.bf16.mxu0 0
    %1062 = vmatmul.mubr.bf16.gmra.mrb[0].mxu0 %v1027
    %v1063 = vpop.f32.mrb[0].mxu0
    %v1064 = vadd.f32 %v999, %v1063
    %v1065 = vpop.f32.mrb[0].mxu0
    %v1066 = vpop.f32.mrb[0].mxu0
    %v1067 = vadd.f32 %v999, %v1066
    %v1068 = vpop.f32.mrb[0].mxu0
    %1069 = vdwg.mxu0
    %v1070 = vadd.f32 %v897, %v1064
    %v1071 = vadd.f32 %v898, %v1067
    %v1072 = vld [vmem:[%s16] sm:$0x1]
    %v1073 = vld [vmem:[%s17] sm:$0x1]
    %v1074 = vsel %vm192, %v1070, 0.0
    %1075 = vadd.xlane.f32.xlu0 %v1074
    %v1076 = vpop.xlane.xlu0 %1075
    %v1077 = vsel %vm192, %v1071, 0.0
    %1078 = vadd.xlane.f32.xlu0 %v1077
    %v1079 = vpop.xlane.xlu0 %1078
    %v1080 = vmul.f32 %v1076, %v199
    %v1081 = vmul.f32 %v1079, %v199
    %v1082 = vsub.f32 %v1070, %v1080
    %v1083 = vsub.f32 %v1071, %v1081
    %v1084 = vmul.f32 %v1082, %v1082
    %v1085 = vmul.f32 %v1083, %v1083
    %v1086 = vsel %vm192, %v1084, 0.0
    %1087 = vadd.xlane.f32.xlu0 %v1086
    %v1088 = vpop.xlane.xlu0 %1087
    %v1089 = vsel %vm192, %v1085, 0.0
    %1090 = vadd.xlane.f32.xlu0 %v1089
    %v1091 = vpop.xlane.xlu0 %1090
    %v1092 = vmul.f32 %v1088, %v199
    %v1093 = vmul.f32 %v1091, %v199
    %v1094 = vadd.f32 %v1092, 1e-12
    %v1095 = vadd.f32 %v1093, 1e-12
    %v1096 = vrsqrt.pop %v1094
    %v1097 = vrsqrt.pop %v1095
    %v1098 = vmul.f32 %v1082, %v1096
    %v1099 = vmul.f32 %v1083, %v1097
    %v1101 = vlaneseq
    %v1102 = vshrl.u32 %v1101, 7
    %v1103 = vsub.s32 0, %v1102
    %v1104 = vrot.slane %v1072, %v1103
    %v1106 = vmul.f32 %v1098, %v1104
    %v1107 = vmul.f32 %v1099, %v1104
    %v1109 = vlaneseq
    %v1110 = vshrl.u32 %v1109, 7
    %v1111 = vsub.s32 0, %v1110
    %v1112 = vrot.slane %v1073, %v1111
    %v1114 = vadd.f32 %v1106, %v1112
    %v1115 = vadd.f32 %v1107, %v1112
    %v1116 = vpack.c.bf16 %v1115, %v1114
    %s1117 = scalar_lea.vmem %s6, 16
    %v1118 = vld [vmem:[%s1117] sm:$0xf]
    %v1119 = vld [vmem:[%s1117 + $0x4] sm:$0xf]
    %v1120 = vld [vmem:[%s1117 + $0x8] sm:$0xf]
    %v1121 = vld [vmem:[%s1117 + $0xc] sm:$0xf]
    %s1122 = scalar_lea.vmem %s7, 1
    %v1123 = vld [vmem:[%s1122] sm:$0x1]
    %v1125 = vlaneseq
    %v1126 = vshrl.u32 %v1125, 7
    %v1127 = vsub.s32 0, %v1126
    %v1128 = vrot.slane %v1123, %v1127
    %v1134 = vunpack.c.l.b16 %v1118
    %v1135 = vunpack.c.l.b16 %v1119
    %v1136 = vunpack.c.l.b16 %v1120
    %v1137 = vunpack.c.l.b16 %v1121
    %v1138 = vpack.c.b16 %v1135, %v1134
    %v1139 = vpack.c.b16 %v1137, %v1136
    %v1143 = vsel %vm192, %v1116, 0
    %1145 = vmatprep.subr.bf16.mxu0 0
    %1146 = vmatpush1.bf16.msra.mxu0 %v1138
    %1147 = vmatprep.subr.bf16.mxu0 0
    %1148 = vmatpush1.bf16.msra.mxu0 %v1139
    %1149 = vmatprep.subr.bf16.mxu0 0
    %1150 = vmatpush1.bf16.msra.mxu0 0
    %1151 = vmatprep.subr.bf16.mxu0 0
    %1152 = vmatpush1.bf16.msra.mxu0 0
    %1153 = vmatprep.subr.bf16.mxu0 0
    %1154 = vmatpush1.bf16.msra.mxu0 0
    %1155 = vmatprep.subr.bf16.mxu0 0
    %1156 = vmatpush1.bf16.msra.mxu0 0
    %1157 = vmatprep.subr.bf16.mxu0 0
    %1158 = vmatpush1.bf16.msra.mxu0 0
    %1159 = vmatprep.subr.bf16.mxu0 0
    %1160 = vmatpush1.bf16.msra.mxu0 0
    %1161 = vmatprep.subr.bf16.mxu0 0
    %1162 = vmatpush1.bf16.msra.mxu0 0
    %1163 = vmatprep.subr.bf16.mxu0 0
    %1164 = vmatpush1.bf16.msra.mxu0 0
    %1165 = vmatprep.subr.bf16.mxu0 0
    %1166 = vmatpush1.bf16.msra.mxu0 0
    %1167 = vmatprep.subr.bf16.mxu0 0
    %1168 = vmatpush1.bf16.msra.mxu0 0
    %1169 = vmatprep.subr.bf16.mxu0 0
    %1170 = vmatpush1.bf16.msra.mxu0 0
    %1171 = vmatprep.subr.bf16.mxu0 0
    %1172 = vmatpush1.bf16.msra.mxu0 0
    %1173 = vmatprep.subr.bf16.mxu0 0
    %1174 = vmatpush1.bf16.msra.mxu0 0
    %1175 = vmatprep.subr.bf16.mxu0 0
    %1176 = vmatpush1.bf16.msra.mxu0 0
    %1177 = vmatprep.mubr.bf16.mxu0 0
    %1178 = vmatmul.mubr.bf16.gmra.mrb[0].mxu0 %v1143
    %v1179 = vpop.f32.mrb[0].mxu0
    %v1180 = vadd.f32 %v1128, %v1179
    %v1181 = vpop.f32.mrb[0].mxu0
    %v1182 = vpop.f32.mrb[0].mxu0
    %v1183 = vadd.f32 %v1128, %v1182
    %v1184 = vpop.f32.mrb[0].mxu0
    %1185 = vdwg.mxu0
    %v1186 = vpack.c.bf16 %v1180, %v1180
    %v1187 = vpack.c.bf16 %v1183, %v1183
    %1189 = vrot.lane.b32.xlu0 %v1186, 96
    %v1190 = vpop.permute.xlu0 %1189
    %v1192 = vsel %vm317, %v1186, 0
    %v1195 = vsel %vm317, %v1190, 0
    %1197 = vmatprep.subr.bf16.mxu0 0
    %1198 = vmatpush1.bf16.xpose.msra.mxu0 %v1195
    %1199 = vmatprep.subr.bf16.mxu0 0
    %1200 = vmatpush1.bf16.xpose.msra.mxu0 0
    %1201 = vmatprep.subr.bf16.mxu0 0
    %1202 = vmatpush1.bf16.xpose.msra.mxu0 0
    %1203 = vmatprep.subr.bf16.mxu0 0
    %1204 = vmatpush1.bf16.xpose.msra.mxu0 0
    %1205 = vmatprep.subr.bf16.mxu0 0
    %1206 = vmatpush1.bf16.xpose.msra.mxu0 0
    %1207 = vmatprep.subr.bf16.mxu0 0
    %1208 = vmatpush1.bf16.xpose.msra.mxu0 0
    %1209 = vmatprep.subr.bf16.mxu0 0
    %1210 = vmatpush1.bf16.xpose.msra.mxu0 0
    %1211 = vmatprep.subr.bf16.mxu0 0
    %1212 = vmatpush1.bf16.xpose.msra.mxu0 0
    %1213 = vmatprep.subr.bf16.mxu0 0
    %1214 = vmatpush1.bf16.xpose.msra.mxu0 0
    %1215 = vmatprep.subr.bf16.mxu0 0
    %1216 = vmatpush1.bf16.xpose.msra.mxu0 0
    %1217 = vmatprep.subr.bf16.mxu0 0
    %1218 = vmatpush1.bf16.xpose.msra.mxu0 0
    %1219 = vmatprep.subr.bf16.mxu0 0
    %1220 = vmatpush1.bf16.xpose.msra.mxu0 0
    %1221 = vmatprep.subr.bf16.mxu0 0
    %1222 = vmatpush1.bf16.xpose.msra.mxu0 0
    %1223 = vmatprep.subr.bf16.mxu0 0
    %1224 = vmatpush1.bf16.xpose.msra.mxu0 0
    %1225 = vmatprep.subr.bf16.mxu0 0
    %1226 = vmatpush1.bf16.xpose.msra.mxu0 0
    %1227 = vmatprep.subr.bf16.mxu0 0
    %1228 = vmatpush1.bf16.xpose.msra.mxu0 0
    %1229 = vmatprep.mubr.bf16.mxu0 0
    %1230 = vmatmul.mubr.bf16.gmra.mrb[0].mxu0 %v1192
    %v1231 = vpop.f32.mrb[0].mxu0
    %v1232 = vadd.f32 0.0, %v1231
    %v1233 = vpop.f32.mrb[0].mxu0
    %v1234 = vpop.f32.mrb[0].mxu0
    %v1235 = vpop.f32.mrb[0].mxu0
    %1236 = vdwg.mxu0
    %1238 = vrot.lane.b32.xlu0 %v1187, 96
    %v1239 = vpop.permute.xlu0 %1238
    %v1241 = vsel %vm317, %v1187, 0
    %v1244 = vsel %vm317, %v1239, 0
    %1246 = vmatprep.subr.bf16.mxu0 0
    %1247 = vmatpush1.bf16.xpose.msra.mxu0 %v1244
    %1248 = vmatprep.subr.bf16.mxu0 0
    %1249 = vmatpush1.bf16.xpose.msra.mxu0 0
    %1250 = vmatprep.subr.bf16.mxu0 0
    %1251 = vmatpush1.bf16.xpose.msra.mxu0 0
    %1252 = vmatprep.subr.bf16.mxu0 0
    %1253 = vmatpush1.bf16.xpose.msra.mxu0 0
    %1254 = vmatprep.subr.bf16.mxu0 0
    %1255 = vmatpush1.bf16.xpose.msra.mxu0 0
    %1256 = vmatprep.subr.bf16.mxu0 0
    %1257 = vmatpush1.bf16.xpose.msra.mxu0 0
    %1258 = vmatprep.subr.bf16.mxu0 0
    %1259 = vmatpush1.bf16.xpose.msra.mxu0 0
    %1260 = vmatprep.subr.bf16.mxu0 0
    %1261 = vmatpush1.bf16.xpose.msra.mxu0 0
    %1262 = vmatprep.subr.bf16.mxu0 0
    %1263 = vmatpush1.bf16.xpose.msra.mxu0 0
    %1264 = vmatprep.subr.bf16.mxu0 0
    %1265 = vmatpush1.bf16.xpose.msra.mxu0 0
    %1266 = vmatprep.subr.bf16.mxu0 0
    %1267 = vmatpush1.bf16.xpose.msra.mxu0 0
    %1268 = vmatprep.subr.bf16.mxu0 0
    %1269 = vmatpush1.bf16.xpose.msra.mxu0 0
    %1270 = vmatprep.subr.bf16.mxu0 0
    %1271 = vmatpush1.bf16.xpose.msra.mxu0 0
    %1272 = vmatprep.subr.bf16.mxu0 0
    %1273 = vmatpush1.bf16.xpose.msra.mxu0 0
    %1274 = vmatprep.subr.bf16.mxu0 0
    %1275 = vmatpush1.bf16.xpose.msra.mxu0 0
    %1276 = vmatprep.subr.bf16.mxu0 0
    %1277 = vmatpush1.bf16.xpose.msra.mxu0 0
    %1278 = vmatprep.mubr.bf16.mxu0 0
    %1279 = vmatmul.mubr.bf16.gmra.mrb[0].mxu0 %v1241
    %v1280 = vpop.f32.mrb[0].mxu0
    %v1281 = vadd.f32 0.0, %v1280
    %v1282 = vpop.f32.mrb[0].mxu0
    %v1283 = vpop.f32.mrb[0].mxu0
    %v1284 = vpop.f32.mrb[0].mxu0
    %1285 = vdwg.mxu0
    %v1286 = vmul.f32 %v1232, 0.25
    %v1287 = vmul.f32 %v1281, 0.25
    %v1288 = vadd.f32 %v1286, %v420
    %v1289 = vadd.f32 %v1287, %v424
    %v1290 = vsel %vm429, %v1288, -inf
    %1291 = vmax.xlane.f32.xlu0 %v1290
    %v1292 = vpop.xlane.xlu0 %1291
    %v1293 = vsel %vm429, %v1289, -inf
    %1294 = vmax.xlane.f32.xlu0 %v1293
    %v1295 = vpop.xlane.xlu0 %1294
    %v1296 = vsub.f32 %v1288, %v1292
    %v1297 = vsub.f32 %v1289, %v1295
    %v1298 = vmul.f32 %v1296, 1.442695
    %v1299 = vpow.pop %v1298
    %v1300 = vmul.f32 %v1297, 1.442695
    %v1301 = vpow.pop %v1300
    %v1302 = vsel %vm429, %v1299, 0.0
    %1303 = vadd.xlane.f32.xlu0 %v1302
    %v1304 = vpop.xlane.xlu0 %1303
    %v1305 = vsel %vm429, %v1301, 0.0
    %1306 = vadd.xlane.f32.xlu0 %v1305
    %v1307 = vpop.xlane.xlu0 %1306
    %v1308 = vrcp.pop %v1304
    %v1309 = vrcp.pop %v1307
    %v1310 = vmul.f32 %v1299, %v1308
    %v1311 = vmul.f32 %v1301, %v1309
    %v1312 = vpack.c.bf16 %v1310, %v1310
    %v1313 = vpack.c.bf16 %v1311, %v1311
    %1314 = vrot.lane.b32.xlu0 %v1186, 64
    %v1315 = vpop.permute.xlu0 %1314
    %v1317 = vsel %vm429, %v1312, 0
    %v1320 = vsel %vm459, %v1315, 0
    %1322 = vmatprep.subr.bf16.mxu0 0
    %1323 = vmatpush1.bf16.msra.mxu0 %v1320
    %1324 = vmatprep.subr.bf16.mxu0 0
    %1325 = vmatpush1.bf16.msra.mxu0 0
    %1326 = vmatprep.subr.bf16.mxu0 0
    %1327 = vmatpush1.bf16.msra.mxu0 0
    %1328 = vmatprep.subr.bf16.mxu0 0
    %1329 = vmatpush1.bf16.msra.mxu0 0
    %1330 = vmatprep.subr.bf16.mxu0 0
    %1331 = vmatpush1.bf16.msra.mxu0 0
    %1332 = vmatprep.subr.bf16.mxu0 0
    %1333 = vmatpush1.bf16.msra.mxu0 0
    %1334 = vmatprep.subr.bf16.mxu0 0
    %1335 = vmatpush1.bf16.msra.mxu0 0
    %1336 = vmatprep.subr.bf16.mxu0 0
    %1337 = vmatpush1.bf16.msra.mxu0 0
    %1338 = vmatprep.subr.bf16.mxu0 0
    %1339 = vmatpush1.bf16.msra.mxu0 0
    %1340 = vmatprep.subr.bf16.mxu0 0
    %1341 = vmatpush1.bf16.msra.mxu0 0
    %1342 = vmatprep.subr.bf16.mxu0 0
    %1343 = vmatpush1.bf16.msra.mxu0 0
    %1344 = vmatprep.subr.bf16.mxu0 0
    %1345 = vmatpush1.bf16.msra.mxu0 0
    %1346 = vmatprep.subr.bf16.mxu0 0
    %1347 = vmatpush1.bf16.msra.mxu0 0
    %1348 = vmatprep.subr.bf16.mxu0 0
    %1349 = vmatpush1.bf16.msra.mxu0 0
    %1350 = vmatprep.subr.bf16.mxu0 0
    %1351 = vmatpush1.bf16.msra.mxu0 0
    %1352 = vmatprep.subr.bf16.mxu0 0
    %1353 = vmatpush1.bf16.msra.mxu0 0
    %1354 = vmatprep.mubr.bf16.mxu0 0
    %1355 = vmatmul.mubr.bf16.gmra.mrb[0].mxu0 %v1317
    %v1356 = vpop.f32.mrb[0].mxu0
    %v1357 = vadd.f32 0.0, %v1356
    %v1358 = vpop.f32.mrb[0].mxu0
    %v1359 = vpop.f32.mrb[0].mxu0
    %v1360 = vpop.f32.mrb[0].mxu0
    %1361 = vdwg.mxu0
    %1362 = vrot.lane.b32.xlu0 %v1187, 64
    %v1363 = vpop.permute.xlu0 %1362
    %v1365 = vsel %vm429, %v1313, 0
    %v1368 = vsel %vm459, %v1363, 0
    %1370 = vmatprep.subr.bf16.mxu0 0
    %1371 = vmatpush1.bf16.msra.mxu0 %v1368
    %1372 = vmatprep.subr.bf16.mxu0 0
    %1373 = vmatpush1.bf16.msra.mxu0 0
    %1374 = vmatprep.subr.bf16.mxu0 0
    %1375 = vmatpush1.bf16.msra.mxu0 0
    %1376 = vmatprep.subr.bf16.mxu0 0
    %1377 = vmatpush1.bf16.msra.mxu0 0
    %1378 = vmatprep.subr.bf16.mxu0 0
    %1379 = vmatpush1.bf16.msra.mxu0 0
    %1380 = vmatprep.subr.bf16.mxu0 0
    %1381 = vmatpush1.bf16.msra.mxu0 0
    %1382 = vmatprep.subr.bf16.mxu0 0
    %1383 = vmatpush1.bf16.msra.mxu0 0
    %1384 = vmatprep.subr.bf16.mxu0 0
    %1385 = vmatpush1.bf16.msra.mxu0 0
    %1386 = vmatprep.subr.bf16.mxu0 0
    %1387 = vmatpush1.bf16.msra.mxu0 0
    %1388 = vmatprep.subr.bf16.mxu0 0
    %1389 = vmatpush1.bf16.msra.mxu0 0
    %1390 = vmatprep.subr.bf16.mxu0 0
    %1391 = vmatpush1.bf16.msra.mxu0 0
    %1392 = vmatprep.subr.bf16.mxu0 0
    %1393 = vmatpush1.bf16.msra.mxu0 0
    %1394 = vmatprep.subr.bf16.mxu0 0
    %1395 = vmatpush1.bf16.msra.mxu0 0
    %1396 = vmatprep.subr.bf16.mxu0 0
    %1397 = vmatpush1.bf16.msra.mxu0 0
    %1398 = vmatprep.subr.bf16.mxu0 0
    %1399 = vmatpush1.bf16.msra.mxu0 0
    %1400 = vmatprep.subr.bf16.mxu0 0
    %1401 = vmatpush1.bf16.msra.mxu0 0
    %1402 = vmatprep.mubr.bf16.mxu0 0
    %1403 = vmatmul.mubr.bf16.gmra.mrb[0].mxu0 %v1365
    %v1404 = vpop.f32.mrb[0].mxu0
    %v1405 = vadd.f32 0.0, %v1404
    %v1406 = vpop.f32.mrb[0].mxu0
    %v1407 = vpop.f32.mrb[0].mxu0
    %v1408 = vpop.f32.mrb[0].mxu0
    %1409 = vdwg.mxu0
    %1410 = vrot.lane.b32.xlu0 %v1186, 112
    %v1411 = vpop.permute.xlu0 %1410
    %1412 = vrot.lane.b32.xlu0 %v1186, 80
    %v1413 = vpop.permute.xlu0 %1412
    %v1415 = vsel %vm317, %v1411, 0
    %v1418 = vsel %vm317, %v1413, 0
    %1420 = vmatprep.subr.bf16.mxu0 0
    %1421 = vmatpush1.bf16.xpose.msra.mxu0 %v1418
    %1422 = vmatprep.subr.bf16.mxu0 0
    %1423 = vmatpush1.bf16.xpose.msra.mxu0 0
    %1424 = vmatprep.subr.bf16.mxu0 0
    %1425 = vmatpush1.bf16.xpose.msra.mxu0 0
    %1426 = vmatprep.subr.bf16.mxu0 0
    %1427 = vmatpush1.bf16.xpose.msra.mxu0 0
    %1428 = vmatprep.subr.bf16.mxu0 0
    %1429 = vmatpush1.bf16.xpose.msra.mxu0 0
    %1430 = vmatprep.subr.bf16.mxu0 0
    %1431 = vmatpush1.bf16.xpose.msra.mxu0 0
    %1432 = vmatprep.subr.bf16.mxu0 0
    %1433 = vmatpush1.bf16.xpose.msra.mxu0 0
    %1434 = vmatprep.subr.bf16.mxu0 0
    %1435 = vmatpush1.bf16.xpose.msra.mxu0 0
    %1436 = vmatprep.subr.bf16.mxu0 0
    %1437 = vmatpush1.bf16.xpose.msra.mxu0 0
    %1438 = vmatprep.subr.bf16.mxu0 0
    %1439 = vmatpush1.bf16.xpose.msra.mxu0 0
    %1440 = vmatprep.subr.bf16.mxu0 0
    %1441 = vmatpush1.bf16.xpose.msra.mxu0 0
    %1442 = vmatprep.subr.bf16.mxu0 0
    %1443 = vmatpush1.bf16.xpose.msra.mxu0 0
    %1444 = vmatprep.subr.bf16.mxu0 0
    %1445 = vmatpush1.bf16.xpose.msra.mxu0 0
    %1446 = vmatprep.subr.bf16.mxu0 0
    %1447 = vmatpush1.bf16.xpose.msra.mxu0 0
    %1448 = vmatprep.subr.bf16.mxu0 0
    %1449 = vmatpush1.bf16.xpose.msra.mxu0 0
    %1450 = vmatprep.subr.bf16.mxu0 0
    %1451 = vmatpush1.bf16.xpose.msra.mxu0 0
    %1452 = vmatprep.mubr.bf16.mxu0 0
    %1453 = vmatmul.mubr.bf16.gmra.mrb[0].mxu0 %v1415
    %v1454 = vpop.f32.mrb[0].mxu0
    %v1455 = vadd.f32 0.0, %v1454
    %v1456 = vpop.f32.mrb[0].mxu0
    %v1457 = vpop.f32.mrb[0].mxu0
    %v1458 = vpop.f32.mrb[0].mxu0
    %1459 = vdwg.mxu0
    %1460 = vrot.lane.b32.xlu0 %v1187, 112
    %v1461 = vpop.permute.xlu0 %1460
    %1462 = vrot.lane.b32.xlu0 %v1187, 80
    %v1463 = vpop.permute.xlu0 %1462
    %v1465 = vsel %vm317, %v1461, 0
    %v1468 = vsel %vm317, %v1463, 0
    %1470 = vmatprep.subr.bf16.mxu0 0
    %1471 = vmatpush1.bf16.xpose.msra.mxu0 %v1468
    %1472 = vmatprep.subr.bf16.mxu0 0
    %1473 = vmatpush1.bf16.xpose.msra.mxu0 0
    %1474 = vmatprep.subr.bf16.mxu0 0
    %1475 = vmatpush1.bf16.xpose.msra.mxu0 0
    %1476 = vmatprep.subr.bf16.mxu0 0
    %1477 = vmatpush1.bf16.xpose.msra.mxu0 0
    %1478 = vmatprep.subr.bf16.mxu0 0
    %1479 = vmatpush1.bf16.xpose.msra.mxu0 0
    %1480 = vmatprep.subr.bf16.mxu0 0
    %1481 = vmatpush1.bf16.xpose.msra.mxu0 0
    %1482 = vmatprep.subr.bf16.mxu0 0
    %1483 = vmatpush1.bf16.xpose.msra.mxu0 0
    %1484 = vmatprep.subr.bf16.mxu0 0
    %1485 = vmatpush1.bf16.xpose.msra.mxu0 0
    %1486 = vmatprep.subr.bf16.mxu0 0
    %1487 = vmatpush1.bf16.xpose.msra.mxu0 0
    %1488 = vmatprep.subr.bf16.mxu0 0
    %1489 = vmatpush1.bf16.xpose.msra.mxu0 0
    %1490 = vmatprep.subr.bf16.mxu0 0
    %1491 = vmatpush1.bf16.xpose.msra.mxu0 0
    %1492 = vmatprep.subr.bf16.mxu0 0
    %1493 = vmatpush1.bf16.xpose.msra.mxu0 0
    %1494 = vmatprep.subr.bf16.mxu0 0
    %1495 = vmatpush1.bf16.xpose.msra.mxu0 0
    %1496 = vmatprep.subr.bf16.mxu0 0
    %1497 = vmatpush1.bf16.xpose.msra.mxu0 0
    %1498 = vmatprep.subr.bf16.mxu0 0
    %1499 = vmatpush1.bf16.xpose.msra.mxu0 0
    %1500 = vmatprep.subr.bf16.mxu0 0
    %1501 = vmatpush1.bf16.xpose.msra.mxu0 0
    %1502 = vmatprep.mubr.bf16.mxu0 0
    %1503 = vmatmul.mubr.bf16.gmra.mrb[0].mxu0 %v1465
    %v1504 = vpop.f32.mrb[0].mxu0
    %v1505 = vadd.f32 0.0, %v1504
    %v1506 = vpop.f32.mrb[0].mxu0
    %v1507 = vpop.f32.mrb[0].mxu0
    %v1508 = vpop.f32.mrb[0].mxu0
    %1509 = vdwg.mxu0
    %v1510 = vmul.f32 %v1455, 0.25
    %v1511 = vmul.f32 %v1505, 0.25
    %v1512 = vadd.f32 %v1510, %v420
    %v1513 = vadd.f32 %v1511, %v424
    %v1514 = vsel %vm429, %v1512, -inf
    %1515 = vmax.xlane.f32.xlu0 %v1514
    %v1516 = vpop.xlane.xlu0 %1515
    %v1517 = vsel %vm429, %v1513, -inf
    %1518 = vmax.xlane.f32.xlu0 %v1517
    %v1519 = vpop.xlane.xlu0 %1518
    %v1520 = vsub.f32 %v1512, %v1516
    %v1521 = vsub.f32 %v1513, %v1519
    %v1522 = vmul.f32 %v1520, 1.442695
    %v1523 = vpow.pop %v1522
    %v1524 = vmul.f32 %v1521, 1.442695
    %v1525 = vpow.pop %v1524
    %v1526 = vsel %vm429, %v1523, 0.0
    %1527 = vadd.xlane.f32.xlu0 %v1526
    %v1528 = vpop.xlane.xlu0 %1527
    %v1529 = vsel %vm429, %v1525, 0.0
    %1530 = vadd.xlane.f32.xlu0 %v1529
    %v1531 = vpop.xlane.xlu0 %1530
    %v1532 = vrcp.pop %v1528
    %v1533 = vrcp.pop %v1531
    %v1534 = vmul.f32 %v1523, %v1532
    %v1535 = vmul.f32 %v1525, %v1533
    %v1536 = vpack.c.bf16 %v1534, %v1534
    %v1537 = vpack.c.bf16 %v1535, %v1535
    %1538 = vrot.lane.b32.xlu0 %v1186, 48
    %v1539 = vpop.permute.xlu0 %1538
    %v1541 = vsel %vm429, %v1536, 0
    %v1544 = vsel %vm459, %v1539, 0
    %1546 = vmatprep.subr.bf16.mxu0 0
    %1547 = vmatpush1.bf16.msra.mxu0 %v1544
    %1548 = vmatprep.subr.bf16.mxu0 0
    %1549 = vmatpush1.bf16.msra.mxu0 0
    %1550 = vmatprep.subr.bf16.mxu0 0
    %1551 = vmatpush1.bf16.msra.mxu0 0
    %1552 = vmatprep.subr.bf16.mxu0 0
    %1553 = vmatpush1.bf16.msra.mxu0 0
    %1554 = vmatprep.subr.bf16.mxu0 0
    %1555 = vmatpush1.bf16.msra.mxu0 0
    %1556 = vmatprep.subr.bf16.mxu0 0
    %1557 = vmatpush1.bf16.msra.mxu0 0
    %1558 = vmatprep.subr.bf16.mxu0 0
    %1559 = vmatpush1.bf16.msra.mxu0 0
    %1560 = vmatprep.subr.bf16.mxu0 0
    %1561 = vmatpush1.bf16.msra.mxu0 0
    %1562 = vmatprep.subr.bf16.mxu0 0
    %1563 = vmatpush1.bf16.msra.mxu0 0
    %1564 = vmatprep.subr.bf16.mxu0 0
    %1565 = vmatpush1.bf16.msra.mxu0 0
    %1566 = vmatprep.subr.bf16.mxu0 0
    %1567 = vmatpush1.bf16.msra.mxu0 0
    %1568 = vmatprep.subr.bf16.mxu0 0
    %1569 = vmatpush1.bf16.msra.mxu0 0
    %1570 = vmatprep.subr.bf16.mxu0 0
    %1571 = vmatpush1.bf16.msra.mxu0 0
    %1572 = vmatprep.subr.bf16.mxu0 0
    %1573 = vmatpush1.bf16.msra.mxu0 0
    %1574 = vmatprep.subr.bf16.mxu0 0
    %1575 = vmatpush1.bf16.msra.mxu0 0
    %1576 = vmatprep.subr.bf16.mxu0 0
    %1577 = vmatpush1.bf16.msra.mxu0 0
    %1578 = vmatprep.mubr.bf16.mxu0 0
    %1579 = vmatmul.mubr.bf16.gmra.mrb[0].mxu0 %v1541
    %v1580 = vpop.f32.mrb[0].mxu0
    %v1581 = vadd.f32 0.0, %v1580
    %v1582 = vpop.f32.mrb[0].mxu0
    %v1583 = vpop.f32.mrb[0].mxu0
    %v1584 = vpop.f32.mrb[0].mxu0
    %1585 = vdwg.mxu0
    %1586 = vrot.lane.b32.xlu0 %v1187, 48
    %v1587 = vpop.permute.xlu0 %1586
    %v1589 = vsel %vm429, %v1537, 0
    %v1592 = vsel %vm459, %v1587, 0
    %1594 = vmatprep.subr.bf16.mxu0 0
    %1595 = vmatpush1.bf16.msra.mxu0 %v1592
    %1596 = vmatprep.subr.bf16.mxu0 0
    %1597 = vmatpush1.bf16.msra.mxu0 0
    %1598 = vmatprep.subr.bf16.mxu0 0
    %1599 = vmatpush1.bf16.msra.mxu0 0
    %1600 = vmatprep.subr.bf16.mxu0 0
    %1601 = vmatpush1.bf16.msra.mxu0 0
    %1602 = vmatprep.subr.bf16.mxu0 0
    %1603 = vmatpush1.bf16.msra.mxu0 0
    %1604 = vmatprep.subr.bf16.mxu0 0
    %1605 = vmatpush1.bf16.msra.mxu0 0
    %1606 = vmatprep.subr.bf16.mxu0 0
    %1607 = vmatpush1.bf16.msra.mxu0 0
    %1608 = vmatprep.subr.bf16.mxu0 0
    %1609 = vmatpush1.bf16.msra.mxu0 0
    %1610 = vmatprep.subr.bf16.mxu0 0
    %1611 = vmatpush1.bf16.msra.mxu0 0
    %1612 = vmatprep.subr.bf16.mxu0 0
    %1613 = vmatpush1.bf16.msra.mxu0 0
    %1614 = vmatprep.subr.bf16.mxu0 0
    %1615 = vmatpush1.bf16.msra.mxu0 0
    %1616 = vmatprep.subr.bf16.mxu0 0
    %1617 = vmatpush1.bf16.msra.mxu0 0
    %1618 = vmatprep.subr.bf16.mxu0 0
    %1619 = vmatpush1.bf16.msra.mxu0 0
    %1620 = vmatprep.subr.bf16.mxu0 0
    %1621 = vmatpush1.bf16.msra.mxu0 0
    %1622 = vmatprep.subr.bf16.mxu0 0
    %1623 = vmatpush1.bf16.msra.mxu0 0
    %1624 = vmatprep.subr.bf16.mxu0 0
    %1625 = vmatpush1.bf16.msra.mxu0 0
    %1626 = vmatprep.mubr.bf16.mxu0 0
    %1627 = vmatmul.mubr.bf16.gmra.mrb[0].mxu0 %v1589
    %v1628 = vpop.f32.mrb[0].mxu0
    %v1629 = vadd.f32 0.0, %v1628
    %v1630 = vpop.f32.mrb[0].mxu0
    %v1631 = vpop.f32.mrb[0].mxu0
    %v1632 = vpop.f32.mrb[0].mxu0
    %1633 = vdwg.mxu0
    %1636 = vrot.lane.b32.xlu0 %v1581, 16
    %v1637 = vpop.permute.xlu0 %1636
    %1638 = vrot.lane.b32.xlu0 %v1629, 16
    %v1639 = vpop.permute.xlu0 %1638
    %v1642 = vsel %vm317, %v1357, %v1637
    %v1643 = vsel %vm317, %v1405, %v1639
    %v1644 = vpack.c.bf16 %v1643, %v1642
    %s1645 = scalar_lea.vmem %s8, 16
    %v1646 = vld [vmem:[%s1645] sm:$0xf]
    %v1647 = vld [vmem:[%s1645 + $0x4] sm:$0xf]
    %v1648 = vld [vmem:[%s1645 + $0x8] sm:$0xf]
    %v1649 = vld [vmem:[%s1645 + $0xc] sm:$0xf]
    %s1650 = scalar_lea.vmem %s9, 1
    %v1651 = vld [vmem:[%s1650] sm:$0x1]
    %v1653 = vlaneseq
    %v1654 = vshrl.u32 %v1653, 7
    %v1655 = vsub.s32 0, %v1654
    %v1656 = vrot.slane %v1651, %v1655
    %v1662 = vunpack.c.l.b16 %v1646
    %v1663 = vunpack.c.l.b16 %v1647
    %v1664 = vunpack.c.l.b16 %v1648
    %v1665 = vunpack.c.l.b16 %v1649
    %v1666 = vpack.c.b16 %v1663, %v1662
    %v1667 = vpack.c.b16 %v1665, %v1664
    %v1671 = vsel %vm192, %v1644, 0
    %1673 = vmatprep.subr.bf16.mxu0 0
    %1674 = vmatpush1.bf16.msra.mxu0 %v1666
    %1675 = vmatprep.subr.bf16.mxu0 0
    %1676 = vmatpush1.bf16.msra.mxu0 %v1667
    %1677 = vmatprep.subr.bf16.mxu0 0
    %1678 = vmatpush1.bf16.msra.mxu0 0
    %1679 = vmatprep.subr.bf16.mxu0 0
    %1680 = vmatpush1.bf16.msra.mxu0 0
    %1681 = vmatprep.subr.bf16.mxu0 0
    %1682 = vmatpush1.bf16.msra.mxu0 0
    %1683 = vmatprep.subr.bf16.mxu0 0
    %1684 = vmatpush1.bf16.msra.mxu0 0
    %1685 = vmatprep.subr.bf16.mxu0 0
    %1686 = vmatpush1.bf16.msra.mxu0 0
    %1687 = vmatprep.subr.bf16.mxu0 0
    %1688 = vmatpush1.bf16.msra.mxu0 0
    %1689 = vmatprep.subr.bf16.mxu0 0
    %1690 = vmatpush1.bf16.msra.mxu0 0
    %1691 = vmatprep.subr.bf16.mxu0 0
    %1692 = vmatpush1.bf16.msra.mxu0 0
    %1693 = vmatprep.subr.bf16.mxu0 0
    %1694 = vmatpush1.bf16.msra.mxu0 0
    %1695 = vmatprep.subr.bf16.mxu0 0
    %1696 = vmatpush1.bf16.msra.mxu0 0
    %1697 = vmatprep.subr.bf16.mxu0 0
    %1698 = vmatpush1.bf16.msra.mxu0 0
    %1699 = vmatprep.subr.bf16.mxu0 0
    %1700 = vmatpush1.bf16.msra.mxu0 0
    %1701 = vmatprep.subr.bf16.mxu0 0
    %1702 = vmatpush1.bf16.msra.mxu0 0
    %1703 = vmatprep.subr.bf16.mxu0 0
    %1704 = vmatpush1.bf16.msra.mxu0 0
    %1705 = vmatprep.mubr.bf16.mxu0 0
    %1706 = vmatmul.mubr.bf16.gmra.mrb[0].mxu0 %v1671
    %v1707 = vpop.f32.mrb[0].mxu0
    %v1708 = vadd.f32 %v1656, %v1707
    %v1709 = vpop.f32.mrb[0].mxu0
    %v1710 = vpop.f32.mrb[0].mxu0
    %v1711 = vadd.f32 %v1656, %v1710
    %v1712 = vpop.f32.mrb[0].mxu0
    %1713 = vdwg.mxu0
    %v1714 = vadd.f32 %v1114, %v1708
    %v1715 = vadd.f32 %v1115, %v1711
    %s1716 = scalar_lea.vmem %s10, 1
    %v1717 = vld [vmem:[%s1716] sm:$0x1]
    %s1718 = scalar_lea.vmem %s11, 1
    %v1719 = vld [vmem:[%s1718] sm:$0x1]
    %v1720 = vsel %vm192, %v1714, 0.0
    %1721 = vadd.xlane.f32.xlu0 %v1720
    %v1722 = vpop.xlane.xlu0 %1721
    %v1723 = vsel %vm192, %v1715, 0.0
    %1724 = vadd.xlane.f32.xlu0 %v1723
    %v1725 = vpop.xlane.xlu0 %1724
    %v1726 = vmul.f32 %v1722, %v199
    %v1727 = vmul.f32 %v1725, %v199
    %v1728 = vsub.f32 %v1714, %v1726
    %v1729 = vsub.f32 %v1715, %v1727
    %v1730 = vmul.f32 %v1728, %v1728
    %v1731 = vmul.f32 %v1729, %v1729
    %v1732 = vsel %vm192, %v1730, 0.0
    %1733 = vadd.xlane.f32.xlu0 %v1732
    %v1734 = vpop.xlane.xlu0 %1733
    %v1735 = vsel %vm192, %v1731, 0.0
    %1736 = vadd.xlane.f32.xlu0 %v1735
    %v1737 = vpop.xlane.xlu0 %1736
    %v1738 = vmul.f32 %v1734, %v199
    %v1739 = vmul.f32 %v1737, %v199
    %v1740 = vadd.f32 %v1738, 1e-12
    %v1741 = vadd.f32 %v1739, 1e-12
    %v1742 = vrsqrt.pop %v1740
    %v1743 = vrsqrt.pop %v1741
    %v1744 = vmul.f32 %v1728, %v1742
    %v1745 = vmul.f32 %v1729, %v1743
    %v1747 = vlaneseq
    %v1748 = vshrl.u32 %v1747, 7
    %v1749 = vsub.s32 0, %v1748
    %v1750 = vrot.slane %v1717, %v1749
    %v1752 = vmul.f32 %v1744, %v1750
    %v1753 = vmul.f32 %v1745, %v1750
    %v1755 = vlaneseq
    %v1756 = vshrl.u32 %v1755, 7
    %v1757 = vsub.s32 0, %v1756
    %v1758 = vrot.slane %v1719, %v1757
    %v1760 = vadd.f32 %v1752, %v1758
    %v1761 = vadd.f32 %v1753, %v1758
    %v1762 = vpack.c.bf16 %v1761, %v1760
    %s1763 = scalar_lea.vmem %s12, 16
    %v1764 = vld [vmem:[%s1763] sm:$0xf]
    %v1765 = vld [vmem:[%s1763 + $0x4] sm:$0xf]
    %v1766 = vld [vmem:[%s1763 + $0x8] sm:$0xf]
    %v1767 = vld [vmem:[%s1763 + $0xc] sm:$0xf]
    %s1768 = scalar_lea.vmem %s13, 1
    %v1769 = vld [vmem:[%s1768] sm:$0x1]
    %v1771 = vlaneseq
    %v1772 = vshrl.u32 %v1771, 7
    %v1773 = vsub.s32 0, %v1772
    %v1774 = vrot.slane %v1769, %v1773
    %v1780 = vunpack.c.l.b16 %v1764
    %v1781 = vunpack.c.l.b16 %v1765
    %v1782 = vunpack.c.l.b16 %v1766
    %v1783 = vunpack.c.l.b16 %v1767
    %v1784 = vpack.c.b16 %v1781, %v1780
    %v1785 = vpack.c.b16 %v1783, %v1782
    %v1789 = vsel %vm192, %v1762, 0
    %1791 = vmatprep.subr.bf16.mxu0 0
    %1792 = vmatpush1.bf16.msra.mxu0 %v1784
    %1793 = vmatprep.subr.bf16.mxu0 0
    %1794 = vmatpush1.bf16.msra.mxu0 %v1785
    %1795 = vmatprep.subr.bf16.mxu0 0
    %1796 = vmatpush1.bf16.msra.mxu0 0
    %1797 = vmatprep.subr.bf16.mxu0 0
    %1798 = vmatpush1.bf16.msra.mxu0 0
    %1799 = vmatprep.subr.bf16.mxu0 0
    %1800 = vmatpush1.bf16.msra.mxu0 0
    %1801 = vmatprep.subr.bf16.mxu0 0
    %1802 = vmatpush1.bf16.msra.mxu0 0
    %1803 = vmatprep.subr.bf16.mxu0 0
    %1804 = vmatpush1.bf16.msra.mxu0 0
    %1805 = vmatprep.subr.bf16.mxu0 0
    %1806 = vmatpush1.bf16.msra.mxu0 0
    %1807 = vmatprep.subr.bf16.mxu0 0
    %1808 = vmatpush1.bf16.msra.mxu0 0
    %1809 = vmatprep.subr.bf16.mxu0 0
    %1810 = vmatpush1.bf16.msra.mxu0 0
    %1811 = vmatprep.subr.bf16.mxu0 0
    %1812 = vmatpush1.bf16.msra.mxu0 0
    %1813 = vmatprep.subr.bf16.mxu0 0
    %1814 = vmatpush1.bf16.msra.mxu0 0
    %1815 = vmatprep.subr.bf16.mxu0 0
    %1816 = vmatpush1.bf16.msra.mxu0 0
    %1817 = vmatprep.subr.bf16.mxu0 0
    %1818 = vmatpush1.bf16.msra.mxu0 0
    %1819 = vmatprep.subr.bf16.mxu0 0
    %1820 = vmatpush1.bf16.msra.mxu0 0
    %1821 = vmatprep.subr.bf16.mxu0 0
    %1822 = vmatpush1.bf16.msra.mxu0 0
    %1823 = vmatprep.mubr.bf16.mxu0 0
    %1824 = vmatmul.mubr.bf16.gmra.mrb[0].mxu0 %v1789
    %v1825 = vpop.f32.mrb[0].mxu0
    %v1826 = vadd.f32 %v1774, %v1825
    %v1827 = vpop.f32.mrb[0].mxu0
    %v1828 = vpop.f32.mrb[0].mxu0
    %v1829 = vadd.f32 %v1774, %v1828
    %v1830 = vpop.f32.mrb[0].mxu0
    %1831 = vdwg.mxu0
    %v1832 = vmul.f32 %v1826, %v1826
    %v1833 = vmul.f32 %v1829, %v1829
    %v1834 = vmul.f32 %v1826, %v1832
    %v1835 = vmul.f32 %v1829, %v1833
    %v1836 = vmul.f32 %v1834, 0.044715
    %v1837 = vmul.f32 %v1835, 0.044715
    %v1838 = vadd.f32 %v1826, %v1836
    %v1839 = vadd.f32 %v1829, %v1837
    %v1840 = vmul.f32 %v1838, 0.7978846
    %v1841 = vmul.f32 %v1839, 0.7978846
    %v1842 = vtanh.pop %v1840
    %v1843 = vtanh.pop %v1841
    %v1844 = vadd.f32 %v1842, 1.0
    %v1845 = vadd.f32 %v1843, 1.0
    %v1846 = vmul.f32 %v1844, 0.5
    %v1847 = vmul.f32 %v1845, 0.5
    %v1848 = vmul.f32 %v1826, %v1846
    %v1849 = vmul.f32 %v1829, %v1847
    %v1850 = vpack.c.bf16 %v1849, %v1848
    %s1851 = scalar_lea.vmem %s14, 32
    %v1852 = vld [vmem:[%s1851] sm:$0xf]
    %v1853 = vld [vmem:[%s1851 + $0x4] sm:$0xf]
    %v1854 = vld [vmem:[%s1851 + $0x8] sm:$0xf]
    %v1855 = vld [vmem:[%s1851 + $0xc] sm:$0xf]
    %v1856 = vld [vmem:[%s1851 + $0x10] sm:$0xf]
    %v1857 = vld [vmem:[%s1851 + $0x14] sm:$0xf]
    %v1858 = vld [vmem:[%s1851 + $0x18] sm:$0xf]
    %v1859 = vld [vmem:[%s1851 + $0x1c] sm:$0xf]
    %s1860 = scalar_lea.vmem %s15, 1
    %v1861 = vld [vmem:[%s1860] sm:$0x1]
    %v1863 = vlaneseq
    %v1864 = vshrl.u32 %v1863, 7
    %v1865 = vsub.s32 0, %v1864
    %v1866 = vrot.slane %v1861, %v1865
    %v1876 = vunpack.c.l.b16 %v1852
    %v1877 = vunpack.c.l.b16 %v1853
    %v1878 = vunpack.c.l.b16 %v1854
    %v1879 = vunpack.c.l.b16 %v1855
    %v1880 = vunpack.c.l.b16 %v1856
    %v1881 = vunpack.c.l.b16 %v1857
    %v1882 = vunpack.c.l.b16 %v1858
    %v1883 = vunpack.c.l.b16 %v1859
    %v1884 = vpack.c.b16 %v1877, %v1876
    %v1885 = vpack.c.b16 %v1879, %v1878
    %v1886 = vpack.c.b16 %v1881, %v1880
    %v1887 = vpack.c.b16 %v1883, %v1882
    %v1893 = vsel %vm1025, %v1850, 0
    %1895 = vmatprep.subr.bf16.mxu0 0
    %1896 = vmatpush1.bf16.msra.mxu0 %v1884
    %1897 = vmatprep.subr.bf16.mxu0 0
    %1898 = vmatpush1.bf16.msra.mxu0 %v1885
    %1899 = vmatprep.subr.bf16.mxu0 0
    %1900 = vmatpush1.bf16.msra.mxu0 %v1886
    %1901 = vmatprep.subr.bf16.mxu0 0
    %1902 = vmatpush1.bf16.msra.mxu0 %v1887
    %1903 = vmatprep.subr.bf16.mxu0 0
    %1904 = vmatpush1.bf16.msra.mxu0 0
    %1905 = vmatprep.subr.bf16.mxu0 0
    %1906 = vmatpush1.bf16.msra.mxu0 0
    %1907 = vmatprep.subr.bf16.mxu0 0
    %1908 = vmatpush1.bf16.msra.mxu0 0
    %1909 = vmatprep.subr.bf16.mxu0 0
    %1910 = vmatpush1.bf16.msra.mxu0 0
    %1911 = vmatprep.subr.bf16.mxu0 0
    %1912 = vmatpush1.bf16.msra.mxu0 0
    %1913 = vmatprep.subr.bf16.mxu0 0
    %1914 = vmatpush1.bf16.msra.mxu0 0
    %1915 = vmatprep.subr.bf16.mxu0 0
    %1916 = vmatpush1.bf16.msra.mxu0 0
    %1917 = vmatprep.subr.bf16.mxu0 0
    %1918 = vmatpush1.bf16.msra.mxu0 0
    %1919 = vmatprep.subr.bf16.mxu0 0
    %1920 = vmatpush1.bf16.msra.mxu0 0
    %1921 = vmatprep.subr.bf16.mxu0 0
    %1922 = vmatpush1.bf16.msra.mxu0 0
    %1923 = vmatprep.subr.bf16.mxu0 0
    %1924 = vmatpush1.bf16.msra.mxu0 0
    %1925 = vmatprep.subr.bf16.mxu0 0
    %1926 = vmatpush1.bf16.msra.mxu0 0
    %1927 = vmatprep.mubr.bf16.mxu0 0
    %1928 = vmatmul.mubr.bf16.gmra.mrb[0].mxu0 %v1893
    %v1929 = vpop.f32.mrb[0].mxu0
    %v1930 = vadd.f32 %v1866, %v1929
    %v1931 = vpop.f32.mrb[0].mxu0
    %v1932 = vpop.f32.mrb[0].mxu0
    %v1933 = vadd.f32 %v1866, %v1932
    %v1934 = vpop.f32.mrb[0].mxu0
    %1935 = vdwg.mxu0
    %v1936 = vadd.f32 %v1760, %v1930
    %v1937 = vadd.f32 %v1761, %v1933
    %s1938 = scalar_lea.vmem %s16, 1
    %v1939 = vld [vmem:[%s1938] sm:$0x1]
    %s1940 = scalar_lea.vmem %s17, 1
    %v1941 = vld [vmem:[%s1940] sm:$0x1]
    %v1942 = vsel %vm192, %v1936, 0.0
    %1943 = vadd.xlane.f32.xlu0 %v1942
    %v1944 = vpop.xlane.xlu0 %1943
    %v1945 = vsel %vm192, %v1937, 0.0
    %1946 = vadd.xlane.f32.xlu0 %v1945
    %v1947 = vpop.xlane.xlu0 %1946
    %v1948 = vmul.f32 %v1944, %v199
    %v1949 = vmul.f32 %v1947, %v199
    %v1950 = vsub.f32 %v1936, %v1948
    %v1951 = vsub.f32 %v1937, %v1949
    %v1952 = vmul.f32 %v1950, %v1950
    %v1953 = vmul.f32 %v1951, %v1951
    %v1954 = vsel %vm192, %v1952, 0.0
    %1955 = vadd.xlane.f32.xlu0 %v1954
    %v1956 = vpop.xlane.xlu0 %1955
    %v1957 = vsel %vm192, %v1953, 0.0
    %1958 = vadd.xlane.f32.xlu0 %v1957
    %v1959 = vpop.xlane.xlu0 %1958
    %v1960 = vmul.f32 %v1956, %v199
    %v1961 = vmul.f32 %v1959, %v199
    %v1962 = vadd.f32 %v1960, 1e-12
    %v1963 = vadd.f32 %v1961, 1e-12
    %v1964 = vrsqrt.pop %v1962
    %v1965 = vrsqrt.pop %v1963
    %v1966 = vmul.f32 %v1950, %v1964
    %v1967 = vmul.f32 %v1951, %v1965
    %v1969 = vlaneseq
    %v1970 = vshrl.u32 %v1969, 7
    %v1971 = vsub.s32 0, %v1970
    %v1972 = vrot.slane %v1939, %v1971
    %v1974 = vmul.f32 %v1966, %v1972
    %v1975 = vmul.f32 %v1967, %v1972
    %v1977 = vlaneseq
    %v1978 = vshrl.u32 %v1977, 7
    %v1979 = vsub.s32 0, %v1978
    %v1980 = vrot.slane %v1941, %v1979
    %v1982 = vadd.f32 %v1974, %v1980
    %v1983 = vadd.f32 %v1975, %v1980
    %v1984 = vpack.c.bf16 %v1982, %v1982
    %v1985 = vpack.c.bf16 %v1983, %v1983
    %v1986 = vld [vmem:[%s18] sm:$0xf]
    %v1987 = vld [vmem:[%s18 + $0x4] sm:$0xf]
    %v1988 = vld [vmem:[%s18 + $0x8] sm:$0xf]
    %v1989 = vld [vmem:[%s18 + $0xc] sm:$0xf]
    %v1990 = vld [vmem:[%s19] sm:$0x1]
    %v1992 = vlaneseq
    %v1993 = vshrl.u32 %v1992, 7
    %v1994 = vsub.s32 0, %v1993
    %v1995 = vrot.slane %v1990, %v1994
    %v1999 = vunpack.c.l.b16 %v1984
    %v2000 = vunpack.c.l.b16 %v1985
    %v2001 = vrot.slane %v2000, 7
    %vm2002 = vcmask 1041409
    %v2003 = vsel %vm2002, %v2001, %v1999
    %v2004 = vpack.c.b16 %v2003, %v2003
    %v2009 = vunpack.c.l.b16 %v1986
    %v2010 = vunpack.c.l.b16 %v1987
    %v2011 = vunpack.c.l.b16 %v1988
    %v2012 = vunpack.c.l.b16 %v1989
    %v2013 = vpack.c.b16 %v2010, %v2009
    %v2014 = vpack.c.b16 %v2012, %v2011
    %v2018 = vsel %vm192, %v2004, 0
    %2020 = vmatprep.subr.bf16.mxu0 0
    %2021 = vmatpush1.bf16.msra.mxu0 %v2013
    %2022 = vmatprep.subr.bf16.mxu0 0
    %2023 = vmatpush1.bf16.msra.mxu0 %v2014
    %2024 = vmatprep.subr.bf16.mxu0 0
    %2025 = vmatpush1.bf16.msra.mxu0 0
    %2026 = vmatprep.subr.bf16.mxu0 0
    %2027 = vmatpush1.bf16.msra.mxu0 0
    %2028 = vmatprep.subr.bf16.mxu0 0
    %2029 = vmatpush1.bf16.msra.mxu0 0
    %2030 = vmatprep.subr.bf16.mxu0 0
    %2031 = vmatpush1.bf16.msra.mxu0 0
    %2032 = vmatprep.subr.bf16.mxu0 0
    %2033 = vmatpush1.bf16.msra.mxu0 0
    %2034 = vmatprep.subr.bf16.mxu0 0
    %2035 = vmatpush1.bf16.msra.mxu0 0
    %2036 = vmatprep.subr.bf16.mxu0 0
    %2037 = vmatpush1.bf16.msra.mxu0 0
    %2038 = vmatprep.subr.bf16.mxu0 0
    %2039 = vmatpush1.bf16.msra.mxu0 0
    %2040 = vmatprep.subr.bf16.mxu0 0
    %2041 = vmatpush1.bf16.msra.mxu0 0
    %2042 = vmatprep.subr.bf16.mxu0 0
    %2043 = vmatpush1.bf16.msra.mxu0 0
    %2044 = vmatprep.subr.bf16.mxu0 0
    %2045 = vmatpush1.bf16.msra.mxu0 0
    %2046 = vmatprep.subr.bf16.mxu0 0
    %2047 = vmatpush1.bf16.msra.mxu0 0
    %2048 = vmatprep.subr.bf16.mxu0 0
    %2049 = vmatpush1.bf16.msra.mxu0 0
    %2050 = vmatprep.subr.bf16.mxu0 0
    %2051 = vmatpush1.bf16.msra.mxu0 0
    %2052 = vmatprep.mubr.bf16.mxu0 0
    %2053 = vmatmul.mubr.bf16.gmra.mrb[0].mxu0 %v2018
    %v2054 = vpop.f32.mrb[0].mxu0
    %v2055 = vadd.f32 %v1995, %v2054
    %v2056 = vpop.f32.mrb[0].mxu0
    %v2057 = vpop.f32.mrb[0].mxu0
    %v2058 = vpop.f32.mrb[0].mxu0
    %2059 = vdwg.mxu0
    %v2060 = vmul.f32 %v2055, %v2055
    %vm2061 = vcmask 1041408
    %v2062 = vsel %vm2061, %v2060, 0.0
    %2063 = vadd.xlane.f32.xlu0 %v2062
    %v2064 = vpop.xlane.xlu0 %2063
    %v2065 = vmax.f32 %v2064, 1e-24
    %v2066 = vrsqrt.pop %v2065
    %v2067 = vmul.f32 %v2055, %v2066
    %2068 = vst [vmem:[#allocation2] sm:$0x3] %v2067
    // Predicated region
    $region82: #{student_forward.1} parent=1 // pred_check
      _
    $region83: #{student_forward.1} parent=1 // pred_check_branch
      %2070 = sbr.rel (0) target = $region85
    $region84: #{student_forward.1} parent=1 // pred_region
      %s2072 = ssub.s32 32, 32
      %2073 = vsyncadd [#allocation3], %s2072
      %s2075 = sshll.u32 [#allocation2], 4
      %s2076 = int_to_ptr.vmem [resolvable:$true] %s2075
      %2078 = dma.vmem_to_hbm [thread:$0]  %s2076, 32, %s20, [#allocation3]
    $region85: #{student_forward.1} parent=1 // pred_fallthru
      _
    // Predicated region
    $region86: #{student_forward.1} parent=1 // pred_check
      _
    $region87: #{student_forward.1} parent=1 // pred_check_branch
      %2080 = sbr.rel (0) target = $region89
    $region88: #{student_forward.1} parent=1 // pred_region
      %2081 = dma.done [#allocation3], 32
    $region89: #{student_forward.1} parent=1 // pred_fallthru
      _
    %2082 = vsyncpa [#allocation3], 1

</llo_original>
